<compile_context>
chip_gen: v5e
topology: v5e:2x2
jax: 0.10.0
libtpu: 0.0.40
codegen_flags: <defaults>
</compile_context>

<pallas_src>
import functools
import math

import jax
import jax.numpy as jnp
from jax.experimental import pallas as pl
from jax.experimental.pallas import tpu as pltpu

LN_EPS = 1e-5                      # torch.nn.LayerNorm default
_VMEM_LIMIT = 64 * 1024 * 1024     # explicit scoped-VMEM budget


def _layer_norm(x, gamma, beta, eps=LN_EPS):
    mu = jnp.mean(x, axis=-1, keepdims=True)
    var = jnp.mean((x - mu) ** 2, axis=-1, keepdims=True)
    return (x - mu) * jax.lax.rsqrt(var + eps) * gamma + beta


def _erf(x):
    # Abramowitz & Stegun 7.1.26 polynomial (|err| < 1.5e-7): only exp / mul /
    # add / where, which all lower cleanly in Mosaic.  Matches torch's exact
    # (erf-based) nn.GELU to float32 precision.
    p = 0.3275911
    a1, a2, a3, a4, a5 = (0.254829592, -0.284496736, 1.421413741,
                          -1.453152027, 1.061405429)
    sgn = jnp.where(x >= 0.0, 1.0, -1.0)
    ax = jnp.abs(x)
    t = 1.0 / (1.0 + p * ax)
    poly = ((((a5 * t + a4) * t + a3) * t + a2) * t + a1) * t
    return sgn * (1.0 - poly * jnp.exp(-ax * ax))


def _gelu_exact(x):
    return 0.5 * x * (1.0 + _erf(x * 0.7071067811865476))


def _softmax_last(x):
    m = jnp.max(x, axis=-1, keepdims=True)
    e = jnp.exp(x - m)
    s = jnp.sum(e, axis=-1, keepdims=True)
    return e * pl.reciprocal(s, approx=True)   # EUP reciprocal, frees VALU


# ---------------------------------------------------------------------------
# Transformer block kernel: one grid step == (one batch element, one q-row tile)
# ---------------------------------------------------------------------------
def _block_kernel(xq_ref, xkv_ref, wq_ref, wk_ref, wv_ref, wproj_ref, bproj_ref,
                  ln_g_ref, ln_b_ref, w1_ref, b1_ref, w2_ref, b2_ref,
                  o_ref, concat_ref, *, num_heads, qkv_dim, seq_len, q_tile):
    xq = xq_ref[0]          # (tq, H) f32  -- the query rows this step owns
    xkv = xkv_ref[0]        # (S,  H) f32  -- full sequence (needed for K / V)

    xq_b = xq.astype(jnp.bfloat16)
    xkv_b = xkv.astype(jnp.bfloat16)

    # Fused Q/K/V projections: one full-width matmul each (MXU-friendly),
    # instead of num_heads tiny (S,H)x(H,D) dots.
    q_all = jnp.dot(xq_b, wq_ref[...], preferred_element_type=jnp.float32)   # (tq, H)
    k_all = jnp.dot(xkv_b, wk_ref[...], preferred_element_type=jnp.float32)  # (S,  H)
    v_all = jnp.dot(xkv_b, wv_ref[...], preferred_element_type=jnp.float32)  # (S,  H)

    # Causal mask for this q-row tile, computed inline (global row offsets).
    q0 = pl.program_id(1) * q_tile
    row = q0 + jax.lax.broadcasted_iota(jnp.int32, (q_tile, seq_len), 0)
    col = jax.lax.broadcasted_iota(jnp.int32, (q_tile, seq_len), 1)
    causal = row >= col

    inv_sqrt_d = 1.0 / math.sqrt(qkv_dim)

    for h in range(num_heads):
        lo, hi = h * qkv_dim, (h + 1) * qkv_dim
        q = q_all[:, lo:hi].astype(jnp.bfloat16)              # (tq, D)
        v = v_all[:, lo:hi].astype(jnp.bfloat16)               # (S,  D)
        # Reproduces PyTorch `k.reshape(B, D, S)`: a row-major memory
        # reinterpretation, NOT a transpose (kept for fidelity to the spec).
        kT = jnp.reshape(k_all[:, lo:hi], (qkv_dim, seq_len)).astype(jnp.bfloat16)
        attn = jnp.dot(q, kT, preferred_element_type=jnp.float32) * inv_sqrt_d
        attn = jnp.where(causal, attn, attn - 1e9)   # == attn - 1e9*(1 - tril)
        p = _softmax_last(attn)                      # dropout == identity
        head = jnp.dot(p.astype(jnp.bfloat16), v,
                       preferred_element_type=jnp.float32)      # (tq, D)
        concat_ref[:, lo:hi] = head                  # "concat" into VMEM scratch

    # Single projection matmul over the concatenated heads (== concat -> matmul).
    proj = jnp.dot(concat_ref[...].astype(jnp.bfloat16), wproj_ref[...],
                   preferred_element_type=jnp.float32) + bproj_ref[...]

    g = ln_g_ref[...]
    b = ln_b_ref[...]
    a = xq + _layer_norm(proj, g, b)                 # dropout == identity

    h1 = jnp.dot(a.astype(jnp.bfloat16), w1_ref[...],
                 preferred_element_type=jnp.float32) + b1_ref[...]
    h1 = _gelu_exact(h1)
    m = jnp.dot(h1.astype(jnp.bfloat16), w2_ref[...],
                preferred_element_type=jnp.float32) + b2_ref[...]

    o_ref[0] = (a + _layer_norm(m, g, b)).astype(o_ref.dtype)


def transformer_block(x, bp, *, num_heads, seq_len, hidden_dim, q_tile=256):
    batch = x.shape[0]
    qkv_dim = hidden_dim // num_heads
    tq = q_tile if (q_tile <= seq_len and seq_len % q_tile == 0) else seq_len
    n_qt = seq_len // tq

    kernel = functools.partial(_block_kernel, num_heads=num_heads,
                               qkv_dim=qkv_dim, seq_len=seq_len, q_tile=tq)

    def const(shape):
        nd = len(shape)
        return pl.BlockSpec(shape, lambda b, qi, _n=nd: (0,) * _n)

    return pl.pallas_call(
        kernel,
        out_shape=jax.ShapeDtypeStruct((batch, seq_len, hidden_dim), jnp.float32),
        grid=(batch, n_qt),
        in_specs=[
            pl.BlockSpec((1, tq, hidden_dim), lambda b, qi: (b, qi, 0)),      # x (q rows)
            pl.BlockSpec((1, seq_len, hidden_dim), lambda b, qi: (b, 0, 0)),  # x (full, K/V)
            const(bp["wq"].shape), const(bp["wk"].shape), const(bp["wv"].shape),
            const(bp["wproj"].shape), const(bp["bproj"].shape),
            const(bp["ln_g"].shape), const(bp["ln_b"].shape),
            const(bp["w1"].shape), const(bp["b1"].shape),
            const(bp["w2"].shape), const(bp["b2"].shape),
        ],
        out_specs=pl.BlockSpec((1, tq, hidden_dim), lambda b, qi: (b, qi, 0)),
        scratch_shapes=[pltpu.VMEM((tq, hidden_dim), jnp.float32)],
        compiler_params=pltpu.CompilerParams(
            dimension_semantics=("parallel", "parallel"),
            vmem_limit_bytes=_VMEM_LIMIT),
    )(x, x, bp["wq"], bp["wk"], bp["wv"], bp["wproj"], bp["bproj"],
      bp["ln_g"], bp["ln_b"], bp["w1"], bp["b1"], bp["w2"], bp["b2"])


# ---------------------------------------------------------------------------
# Final LayerNorm + lm_head kernel (tiled over the vocabulary axis).
# ---------------------------------------------------------------------------
def _lm_head_kernel(x_ref, ln_g_ref, ln_b_ref, w_ref, b_ref, o_ref):
    x = x_ref[0]                                           # (tq, H)
    xn = _layer_norm(x, ln_g_ref[...], ln_b_ref[...])
    o_ref[0] = (jnp.dot(xn.astype(jnp.bfloat16), w_ref[...],
                        preferred_element_type=jnp.float32)
                + b_ref[...]).astype(o_ref.dtype)


def lm_head(x, ln_g, ln_b, w, b, *, q_tile=256, v_tile=256):
    batch, seq_len, hidden = x.shape
    vocab = w.shape[1]
    tq = q_tile if (q_tile <= seq_len and seq_len % q_tile == 0) else seq_len
    tv = v_tile if (v_tile <= vocab and vocab % v_tile == 0) else vocab
    n_qt = seq_len // tq
    n_vt = vocab // tv
    return pl.pallas_call(
        _lm_head_kernel,
        out_shape=jax.ShapeDtypeStruct((batch, seq_len, vocab), jnp.float32),
        grid=(batch, n_qt, n_vt),
        in_specs=[
            pl.BlockSpec((1, tq, hidden), lambda b, qi, vi: (b, qi, 0)),
            pl.BlockSpec((1, hidden), lambda b, qi, vi: (0, 0)),
            pl.BlockSpec((1, hidden), lambda b, qi, vi: (0, 0)),
            pl.BlockSpec((hidden, tv), lambda b, qi, vi: (0, vi)),
            pl.BlockSpec((1, tv), lambda b, qi, vi: (0, vi)),
        ],
        out_specs=pl.BlockSpec((1, tq, tv), lambda b, qi, vi: (b, qi, vi)),
        compiler_params=pltpu.CompilerParams(
            dimension_semantics=("parallel", "parallel", "arbitrary"),
            vmem_limit_bytes=_VMEM_LIMIT),
    )(x, ln_g, ln_b, w, b)


# ---------------------------------------------------------------------------
# Full forward pass (embedding gather + pos-encoding add is plain-JAX glue).
# ---------------------------------------------------------------------------
def transformer_forward(token_ids, params, *, num_heads, seq_len, hidden_dim):
    x = params["embedding"][token_ids] + params["pos"]     # (B, S, H) f32
    for bp in params["blocks"]:
        x = transformer_block(x, bp, num_heads=num_heads, seq_len=seq_len,
                              hidden_dim=hidden_dim)
    return lm_head(x, params["ln_g"], params["ln_b"],
                   params["lm_w"], params["lm_b"])


def init_params(key, *, vocab_size, hidden_dim, seq_len, num_heads, num_blocks):
    qkv_dim = hidden_dim // num_heads
    keys = jax.random.split(key, 4 + num_blocks)
    n = lambda k, shape, s=0.02: s * jax.random.normal(k, shape, jnp.float32)

    def fuse_heads(w):  # (NH, H, D) -> (H, NH*D); columns h*D:(h+1)*D == head h
        return jnp.transpose(w, (1, 0, 2)).reshape(hidden_dim, num_heads * qkv_dim)

    params = {
        "embedding": jax.random.normal(keys[0], (vocab_size, hidden_dim), jnp.float32),
        "pos": jax.random.normal(keys[1], (seq_len, hidden_dim), jnp.float32),
        # shared self.layer_norm (used in every block AND at the end)
        "ln_g": jnp.ones((1, hidden_dim), jnp.float32),
        "ln_b": jnp.zeros((1, hidden_dim), jnp.float32),
        "lm_w": n(keys[2], (hidden_dim, vocab_size)).astype(jnp.bfloat16),
        "lm_b": n(keys[3], (1, vocab_size)),
        "blocks": [],
    }
    for i in range(num_blocks):
        bk = jax.random.split(keys[4 + i], 8)
        params["blocks"].append({
            "wq": fuse_heads(n(bk[0], (num_heads, hidden_dim, qkv_dim))).astype(jnp.bfloat16),
            "wk": fuse_heads(n(bk[1], (num_heads, hidden_dim, qkv_dim))).astype(jnp.bfloat16),
            "wv": fuse_heads(n(bk[2], (num_heads, hidden_dim, qkv_dim))).astype(jnp.bfloat16),
            "wproj": n(bk[3], (hidden_dim, hidden_dim)).astype(jnp.bfloat16),
            "bproj": n(bk[4], (1, hidden_dim)),
            "ln_g": params["ln_g"],
            "ln_b": params["ln_b"],
            "w1": n(bk[5], (hidden_dim, 4 * hidden_dim)).astype(jnp.bfloat16),
            "b1": jnp.zeros((1, 4 * hidden_dim), jnp.float32),
            "w2": n(bk[6], (4 * hidden_dim, hidden_dim)).astype(jnp.bfloat16),
            "b2": n(bk[7], (1, hidden_dim)),
        })
    return params


if __name__ == "__main__":
    # small demo shapes: batch=2, seq=8, hidden=32, heads=4 (D=8), 2 blocks,
    # vocab=512.  (With D == seq_len the PyTorch `k.reshape(B, D, S)` is the
    # identity reinterpretation; the kernel code handles the general reshape.)
    B, S, H, NH, NB, V = 2, 8, 32, 4, 2, 512

    key = jax.random.PRNGKey(0)
    pkey, xkey = jax.random.split(key)
    params = init_params(pkey, vocab_size=V, hidden_dim=H, seq_len=S,
                         num_heads=NH, num_blocks=NB)
    token_ids = jax.random.randint(xkey, (B, S), 0, V, dtype=jnp.int32)

    fwd = jax.jit(functools.partial(transformer_forward, num_heads=NH,
                                    seq_len=S, hidden_dim=H))
    logits = fwd(token_ids, params)
    jax.block_until_ready(logits)
    assert logits.shape == (B, S, V) and logits.dtype == jnp.float32
    assert bool(jnp.all(jnp.isfinite(logits)))
    print("KERNEL_OK")
</pallas_src>

<mosaic_0001>
module attributes {stable_mosaic.version = 11 : i64} {
  func.func @_lm_head_kernel(%arg0: i32, %arg1: i32, %arg2: i32, %arg3: memref<1x8x32xf32, #tpu.memory_space<vmem>>, %arg4: memref<1x32xf32, #tpu.memory_space<vmem>>, %arg5: memref<1x32xf32, #tpu.memory_space<vmem>>, %arg6: memref<32x256xbf16, #tpu.memory_space<vmem>>, %arg7: memref<1x256xf32, #tpu.memory_space<vmem>>, %arg8: memref<1x8x256xf32, #tpu.memory_space<vmem>>) attributes {dimension_semantics = [#tpu.dimension_semantics<parallel>, #tpu.dimension_semantics<parallel>, #tpu.dimension_semantics<arbitrary>], iteration_bounds = array<i64: 2, 1, 2>, scalar_prefetch = 0 : i64, scratch_operands = 0 : i64, tpu.core_type = #tpu.core_type<tc>, window_params = [{transform_indices = @transform_0, window_bounds = array<i64: 1, 8, 32>}, {pipeline_mode = #tpu.pipeline_mode<synchronous>, transform_indices = @transform_1, window_bounds = array<i64: 1, 32>}, {pipeline_mode = #tpu.pipeline_mode<synchronous>, transform_indices = @transform_2, window_bounds = array<i64: 1, 32>}, {transform_indices = @transform_3, window_bounds = array<i64: 32, 256>}, {transform_indices = @transform_4, window_bounds = array<i64: 1, 256>}, {transform_indices = @transform_5, window_bounds = array<i64: 1, 8, 256>}]} {
    %c0 = arith.constant 0 : index
    %c0_0 = arith.constant 0 : index
    %c0_1 = arith.constant 0 : index
    %0 = vector.load %arg3[%c0, %c0_0, %c0_1] : memref<1x8x32xf32, #tpu.memory_space<vmem>>, vector<1x8x32xf32>
    %1 = vector.shape_cast %0 : vector<1x8x32xf32> to vector<8x32xf32>
    %c0_2 = arith.constant 0 : index
    %c0_3 = arith.constant 0 : index
    %2 = vector.load %arg4[%c0_2, %c0_3] : memref<1x32xf32, #tpu.memory_space<vmem>>, vector<1x32xf32>
    %c0_4 = arith.constant 0 : index
    %c0_5 = arith.constant 0 : index
    %3 = vector.load %arg5[%c0_4, %c0_5] : memref<1x32xf32, #tpu.memory_space<vmem>>, vector<1x32xf32>
    %cst = arith.constant dense<0.000000e+00> : vector<8xf32>
    %4 = vector.multi_reduction <add>, %1, %cst [1] : vector<8x32xf32> to vector<8xf32>
    %5 = vector.shape_cast %4 : vector<8xf32> to vector<8x1xf32>
    %cst_6 = arith.constant 3.200000e+01 : f32
    %6 = vector.broadcast %cst_6 : f32 to vector<8x1xf32>
    %7 = arith.divf %5, %6 : vector<8x1xf32>
    %8 = vector.broadcast %7 : vector<8x1xf32> to vector<8x32xf32>
    %9 = arith.subf %1, %8 : vector<8x32xf32>
    %10 = arith.mulf %9, %9 : vector<8x32xf32>
    %cst_7 = arith.constant dense<0.000000e+00> : vector<8xf32>
    %11 = vector.multi_reduction <add>, %10, %cst_7 [1] : vector<8x32xf32> to vector<8xf32>
    %12 = vector.shape_cast %11 : vector<8xf32> to vector<8x1xf32>
    %cst_8 = arith.constant 3.200000e+01 : f32
    %13 = vector.broadcast %cst_8 : f32 to vector<8x1xf32>
    %14 = arith.divf %12, %13 : vector<8x1xf32>
    %15 = vector.broadcast %7 : vector<8x1xf32> to vector<8x32xf32>
    %16 = arith.subf %1, %15 : vector<8x32xf32>
    %cst_9 = arith.constant 9.99999974E-6 : f32
    %17 = vector.broadcast %cst_9 : f32 to vector<8x1xf32>
    %18 = arith.addf %14, %17 : vector<8x1xf32>
    %19 = math.rsqrt %18 : vector<8x1xf32>
    %20 = vector.broadcast %19 : vector<8x1xf32> to vector<8x32xf32>
    %21 = arith.mulf %16, %20 : vector<8x32xf32>
    %22 = vector.broadcast %2 : vector<1x32xf32> to vector<8x32xf32>
    %23 = arith.mulf %21, %22 : vector<8x32xf32>
    %24 = vector.broadcast %3 : vector<1x32xf32> to vector<8x32xf32>
    %25 = arith.addf %23, %24 : vector<8x32xf32>
    %26 = arith.truncf %25 : vector<8x32xf32> to vector<8x32xbf16>
    %c0_10 = arith.constant 0 : index
    %c0_11 = arith.constant 0 : index
    %27 = vector.load %arg6[%c0_10, %c0_11] : memref<32x256xbf16, #tpu.memory_space<vmem>>, vector<32x256xbf16>
    %cst_12 = arith.constant dense<0.000000e+00> : vector<8x256xf32>
    %28 = tpu.matmul %26, %27, %cst_12 {dimension_numbers = #tpu.dot_dimension_numbers<[1], [0], [0], [1], [0, 0, 1, 1], [], []>} : vector<8x32xbf16>, vector<32x256xbf16>, vector<8x256xf32> -> vector<8x256xf32>
    %c0_13 = arith.constant 0 : index
    %c0_14 = arith.constant 0 : index
    %29 = vector.load %arg7[%c0_13, %c0_14] : memref<1x256xf32, #tpu.memory_space<vmem>>, vector<1x256xf32>
    %30 = vector.broadcast %29 : vector<1x256xf32> to vector<8x256xf32>
    %31 = arith.addf %28, %30 : vector<8x256xf32>
    %c0_15 = arith.constant 0 : index
    %c0_16 = arith.constant 0 : index
    %c0_17 = arith.constant 0 : index
    %32 = vector.load %arg8[%c0_15, %c0_16, %c0_17] : memref<1x8x256xf32, #tpu.memory_space<vmem>>, vector<1x8x256xf32>
    %33 = vector.shape_cast %32 : vector<1x8x256xf32> to vector<8x256xf32>
    %34 = vector.shape_cast %31 : vector<8x256xf32> to vector<1x8x256xf32>
    tpu.vector_store %arg8[%c0_15, %c0_16, %c0_17], %34 {strides = array<i32>} : memref<1x8x256xf32, #tpu.memory_space<vmem>>, vector<1x8x256xf32>,
    return
  }
  func.func @transform_0(%arg0: i32, %arg1: i32, %arg2: i32) -> (i32, i32, i32) {
    %c0_i32 = arith.constant 0 : i32
    %c0_i32_0 = arith.constant 0 : i32
    return %arg0, %arg1, %c0_i32 : i32, i32, i32
  }
  func.func @transform_1(%arg0: i32, %arg1: i32, %arg2: i32) -> (i32, i32) {
    %c0_i32 = arith.constant 0 : i32
    %c0_i32_0 = arith.constant 0 : i32
    %c0_i32_1 = arith.constant 0 : i32
    return %c0_i32, %c0_i32_0 : i32, i32
  }
  func.func @transform_2(%arg0: i32, %arg1: i32, %arg2: i32) -> (i32, i32) {
    %c0_i32 = arith.constant 0 : i32
    %c0_i32_0 = arith.constant 0 : i32
    %c0_i32_1 = arith.constant 0 : i32
    return %c0_i32, %c0_i32_0 : i32, i32
  }
  func.func @transform_3(%arg0: i32, %arg1: i32, %arg2: i32) -> (i32, i32) {
    %c0_i32 = arith.constant 0 : i32
    %c0_i32_0 = arith.constant 0 : i32
    return %c0_i32, %arg2 : i32, i32
  }
  func.func @transform_4(%arg0: i32, %arg1: i32, %arg2: i32) -> (i32, i32) {
    %c0_i32 = arith.constant 0 : i32
    %c0_i32_0 = arith.constant 0 : i32
    return %c0_i32, %arg2 : i32, i32
  }
  func.func @transform_5(%arg0: i32, %arg1: i32, %arg2: i32) -> (i32, i32, i32) {
    %c0_i32 = arith.constant 0 : i32
    return %arg0, %arg1, %arg2 : i32, i32, i32
  }
}

module attributes {stable_mosaic.version = 11 : i64} {
  func.func @_block_kernel(%arg0: i32, %arg1: i32, %arg2: memref<1x8x32xf32, #tpu.memory_space<vmem>>, %arg3: memref<1x8x32xf32, #tpu.memory_space<vmem>>, %arg4: memref<32x32xbf16, #tpu.memory_space<vmem>>, %arg5: memref<32x32xbf16, #tpu.memory_space<vmem>>, %arg6: memref<32x32xbf16, #tpu.memory_space<vmem>>, %arg7: memref<32x32xbf16, #tpu.memory_space<vmem>>, %arg8: memref<1x32xf32, #tpu.memory_space<vmem>>, %arg9: memref<1x32xf32, #tpu.memory_space<vmem>>, %arg10: memref<1x32xf32, #tpu.memory_space<vmem>>, %arg11: memref<32x128xbf16, #tpu.memory_space<vmem>>, %arg12: memref<1x128xf32, #tpu.memory_space<vmem>>, %arg13: memref<128x32xbf16, #tpu.memory_space<vmem>>, %arg14: memref<1x32xf32, #tpu.memory_space<vmem>>, %arg15: memref<1x8x32xf32, #tpu.memory_space<vmem>>, %arg16: memref<8x32xf32, #tpu.memory_space<vmem>>) attributes {dimension_semantics = [#tpu.dimension_semantics<parallel>, #tpu.dimension_semantics<parallel>], iteration_bounds = array<i64: 2, 1>, scalar_prefetch = 0 : i64, scratch_operands = 1 : i64, tpu.core_type = #tpu.core_type<tc>, window_params = [{transform_indices = @transform_0, window_bounds = array<i64: 1, 8, 32>}, {transform_indices = @transform_1, window_bounds = array<i64: 1, 8, 32>}, {pipeline_mode = #tpu.pipeline_mode<synchronous>, transform_indices = @transform_2, window_bounds = array<i64: 32, 32>}, {pipeline_mode = #tpu.pipeline_mode<synchronous>, transform_indices = @transform_3, window_bounds = array<i64: 32, 32>}, {pipeline_mode = #tpu.pipeline_mode<synchronous>, transform_indices = @transform_4, window_bounds = array<i64: 32, 32>}, {pipeline_mode = #tpu.pipeline_mode<synchronous>, transform_indices = @transform_5, window_bounds = array<i64: 32, 32>}, {pipeline_mode = #tpu.pipeline_mode<synchronous>, transform_indices = @transform_6, window_bounds = array<i64: 1, 32>}, {pipeline_mode = #tpu.pipeline_mode<synchronous>, transform_indices = @transform_7, window_bounds = array<i64: 1, 32>}, {pipeline_mode = #tpu.pipeline_mode<synchronous>, transform_indices = @transform_8, window_bounds = array<i64: 1, 32>}, {pipeline_mode = #tpu.pipeline_mode<synchronous>, transform_indices = @transform_9, window_bounds = array<i64: 32, 128>}, {pipeline_mode = #tpu.pipeline_mode<synchronous>, transform_indices = @transform_10, window_bounds = array<i64: 1, 128>}, {pipeline_mode = #tpu.pipeline_mode<synchronous>, transform_indices = @transform_11, window_bounds = array<i64: 128, 32>}, {pipeline_mode = #tpu.pipeline_mode<synchronous>, transform_indices = @transform_12, window_bounds = array<i64: 1, 32>}, {transform_indices = @transform_13, window_bounds = array<i64: 1, 8, 32>}]} {
    %c0 = arith.constant 0 : index
    %c0_0 = arith.constant 0 : index
    %c0_1 = arith.constant 0 : index
    %0 = vector.load %arg2[%c0, %c0_0, %c0_1] : memref<1x8x32xf32, #tpu.memory_space<vmem>>, vector<1x8x32xf32>
    %1 = vector.shape_cast %0 : vector<1x8x32xf32> to vector<8x32xf32>
    %c0_2 = arith.constant 0 : index
    %c0_3 = arith.constant 0 : index
    %c0_4 = arith.constant 0 : index
    %2 = vector.load %arg3[%c0_2, %c0_3, %c0_4] : memref<1x8x32xf32, #tpu.memory_space<vmem>>, vector<1x8x32xf32>
    %3 = vector.shape_cast %2 : vector<1x8x32xf32> to vector<8x32xf32>
    %4 = arith.truncf %1 : vector<8x32xf32> to vector<8x32xbf16>
    %5 = arith.truncf %3 : vector<8x32xf32> to vector<8x32xbf16>
    %c0_5 = arith.constant 0 : index
    %c0_6 = arith.constant 0 : index
    %6 = vector.load %arg4[%c0_5, %c0_6] : memref<32x32xbf16, #tpu.memory_space<vmem>>, vector<32x32xbf16>
    %cst = arith.constant dense<0.000000e+00> : vector<8x32xf32>
    %7 = tpu.matmul %4, %6, %cst {dimension_numbers = #tpu.dot_dimension_numbers<[1], [0], [0], [1], [0, 0, 1, 1], [], []>} : vector<8x32xbf16>, vector<32x32xbf16>, vector<8x32xf32> -> vector<8x32xf32>
    %c0_7 = arith.constant 0 : index
    %c0_8 = arith.constant 0 : index
    %8 = vector.load %arg5[%c0_7, %c0_8] : memref<32x32xbf16, #tpu.memory_space<vmem>>, vector<32x32xbf16>
    %cst_9 = arith.constant dense<0.000000e+00> : vector<8x32xf32>
    %9 = tpu.matmul %5, %8, %cst_9 {dimension_numbers = #tpu.dot_dimension_numbers<[1], [0], [0], [1], [0, 0, 1, 1], [], []>} : vector<8x32xbf16>, vector<32x32xbf16>, vector<8x32xf32> -> vector<8x32xf32>
    %c0_10 = arith.constant 0 : index
    %c0_11 = arith.constant 0 : index
    %10 = vector.load %arg6[%c0_10, %c0_11] : memref<32x32xbf16, #tpu.memory_space<vmem>>, vector<32x32xbf16>
    %cst_12 = arith.constant dense<0.000000e+00> : vector<8x32xf32>
    %11 = tpu.matmul %5, %10, %cst_12 {dimension_numbers = #tpu.dot_dimension_numbers<[1], [0], [0], [1], [0, 0, 1, 1], [], []>} : vector<8x32xbf16>, vector<32x32xbf16>, vector<8x32xf32> -> vector<8x32xf32>
    %c8_i32 = arith.constant 8 : i32
    %12 = arith.muli %arg1, %c8_i32 : i32
    %13 = tpu.iota {dimensions = array<i32: 0>} : vector<8x8xi32>
    %14 = vector.broadcast %12 : i32 to vector<8x8xi32>
    %15 = arith.addi %14, %13 : vector<8x8xi32>
    %16 = tpu.iota {dimensions = array<i32: 1>} : vector<8x8xi32>
    %17 = arith.cmpi sge, %15, %16 : vector<8x8xi32>
    %18 = vector.extract_strided_slice %7 {offsets = [0, 0], sizes = [8, 8], strides = [1, 1]} : vector<8x32xf32> to vector<8x8xf32>
    %19 = arith.truncf %18 : vector<8x8xf32> to vector<8x8xbf16>
    %20 = vector.extract_strided_slice %11 {offsets = [0, 0], sizes = [8, 8], strides = [1, 1]} : vector<8x32xf32> to vector<8x8xf32>
    %21 = arith.truncf %20 : vector<8x8xf32> to vector<8x8xbf16>
    %22 = vector.extract_strided_slice %9 {offsets = [0, 0], sizes = [8, 8], strides = [1, 1]} : vector<8x32xf32> to vector<8x8xf32>
    %23 = arith.truncf %22 : vector<8x8xf32> to vector<8x8xbf16>
    %cst_13 = arith.constant dense<0.000000e+00> : vector<8x8xf32>
    %24 = tpu.matmul %19, %23, %cst_13 {dimension_numbers = #tpu.dot_dimension_numbers<[1], [0], [0], [1], [0, 0, 1, 1], [], []>} : vector<8x8xbf16>, vector<8x8xbf16>, vector<8x8xf32> -> vector<8x8xf32>
    %cst_14 = arith.constant 0.353553385 : f32
    %25 = vector.broadcast %cst_14 : f32 to vector<8x8xf32>
    %26 = arith.mulf %24, %25 : vector<8x8xf32>
    %cst_15 = arith.constant 1.000000e+09 : f32
    %27 = vector.broadcast %cst_15 : f32 to vector<8x8xf32>
    %28 = arith.subf %26, %27 : vector<8x8xf32>
    %29 = arith.select %17, %26, %28 : vector<8x8xi1>, vector<8x8xf32>
    %cst_16 = arith.constant dense<0xFF800000> : vector<8xf32>
    %30 = vector.multi_reduction <maximumf>, %29, %cst_16 [1] : vector<8x8xf32> to vector<8xf32>
    %31 = vector.shape_cast %30 : vector<8xf32> to vector<8x1xf32>
    %32 = vector.broadcast %31 : vector<8x1xf32> to vector<8x8xf32>
    %33 = arith.subf %29, %32 : vector<8x8xf32>
    %34 = math.exp %33 : vector<8x8xf32>
    %cst_17 = arith.constant dense<0.000000e+00> : vector<8xf32>
    %35 = vector.multi_reduction <add>, %34, %cst_17 [1] : vector<8x8xf32> to vector<8xf32>
    %36 = vector.shape_cast %35 : vector<8xf32> to vector<8x1xf32>
    %37 = tpu.reciprocal %36 {approx = true} : vector<8x1xf32> -> vector<8x1xf32>
    %38 = vector.broadcast %37 : vector<8x1xf32> to vector<8x8xf32>
    %39 = arith.mulf %34, %38 : vector<8x8xf32>
    %40 = arith.truncf %39 : vector<8x8xf32> to vector<8x8xbf16>
    %cst_18 = arith.constant dense<0.000000e+00> : vector<8x8xf32>
    %41 = tpu.matmul %40, %21, %cst_18 {dimension_numbers = #tpu.dot_dimension_numbers<[1], [0], [0], [1], [0, 0, 1, 1], [], []>} : vector<8x8xbf16>, vector<8x8xbf16>, vector<8x8xf32> -> vector<8x8xf32>
    %c0_19 = arith.constant 0 : index
    %c0_20 = arith.constant 0 : index
    %42 = vector.load %arg16[%c0_19, %c0_20] : memref<8x32xf32, #tpu.memory_space<vmem>>, vector<8x8xf32>
    tpu.vector_store %arg16[%c0_19, %c0_20], %41 {strides = array<i32>} : memref<8x32xf32, #tpu.memory_space<vmem>>, vector<8x8xf32>,
    %43 = vector.extract_strided_slice %7 {offsets = [0, 8], sizes = [8, 8], strides = [1, 1]} : vector<8x32xf32> to vector<8x8xf32>
    %44 = arith.truncf %43 : vector<8x8xf32> to vector<8x8xbf16>
    %45 = vector.extract_strided_slice %11 {offsets = [0, 8], sizes = [8, 8], strides = [1, 1]} : vector<8x32xf32> to vector<8x8xf32>
    %46 = arith.truncf %45 : vector<8x8xf32> to vector<8x8xbf16>
    %47 = vector.extract_strided_slice %9 {offsets = [0, 8], sizes = [8, 8], strides = [1, 1]} : vector<8x32xf32> to vector<8x8xf32>
    %48 = arith.truncf %47 : vector<8x8xf32> to vector<8x8xbf16>
    %cst_21 = arith.constant dense<0.000000e+00> : vector<8x8xf32>
    %49 = tpu.matmul %44, %48, %cst_21 {dimension_numbers = #tpu.dot_dimension_numbers<[1], [0], [0], [1], [0, 0, 1, 1], [], []>} : vector<8x8xbf16>, vector<8x8xbf16>, vector<8x8xf32> -> vector<8x8xf32>
    %cst_22 = arith.constant 0.353553385 : f32
    %50 = vector.broadcast %cst_22 : f32 to vector<8x8xf32>
    %51 = arith.mulf %49, %50 : vector<8x8xf32>
    %cst_23 = arith.constant 1.000000e+09 : f32
    %52 = vector.broadcast %cst_23 : f32 to vector<8x8xf32>
    %53 = arith.subf %51, %52 : vector<8x8xf32>
    %54 = arith.select %17, %51, %53 : vector<8x8xi1>, vector<8x8xf32>
    %cst_24 = arith.constant dense<0xFF800000> : vector<8xf32>
    %55 = vector.multi_reduction <maximumf>, %54, %cst_24 [1] : vector<8x8xf32> to vector<8xf32>
    %56 = vector.shape_cast %55 : vector<8xf32> to vector<8x1xf32>
    %57 = vector.broadcast %56 : vector<8x1xf32> to vector<8x8xf32>
    %58 = arith.subf %54, %57 : vector<8x8xf32>
    %59 = math.exp %58 : vector<8x8xf32>
    %cst_25 = arith.constant dense<0.000000e+00> : vector<8xf32>
    %60 = vector.multi_reduction <add>, %59, %cst_25 [1] : vector<8x8xf32> to vector<8xf32>
    %61 = vector.shape_cast %60 : vector<8xf32> to vector<8x1xf32>
    %62 = tpu.reciprocal %61 {approx = true} : vector<8x1xf32> -> vector<8x1xf32>
    %63 = vector.broadcast %62 : vector<8x1xf32> to vector<8x8xf32>
    %64 = arith.mulf %59, %63 : vector<8x8xf32>
    %65 = arith.truncf %64 : vector<8x8xf32> to vector<8x8xbf16>
    %cst_26 = arith.constant dense<0.000000e+00> : vector<8x8xf32>
    %66 = tpu.matmul %65, %46, %cst_26 {dimension_numbers = #tpu.dot_dimension_numbers<[1], [0], [0], [1], [0, 0, 1, 1], [], []>} : vector<8x8xbf16>, vector<8x8xbf16>, vector<8x8xf32> -> vector<8x8xf32>
    %c0_27 = arith.constant 0 : index
    %c8 = arith.constant 8 : index
    %67 = vector.load %arg16[%c0_27, %c8] : memref<8x32xf32, #tpu.memory_space<vmem>>, vector<8x8xf32>
    tpu.vector_store %arg16[%c0_27, %c8], %66 {strides = array<i32>} : memref<8x32xf32, #tpu.memory_space<vmem>>, vector<8x8xf32>,
    %68 = vector.extract_strided_slice %7 {offsets = [0, 16], sizes = [8, 8], strides = [1, 1]} : vector<8x32xf32> to vector<8x8xf32>
    %69 = arith.truncf %68 : vector<8x8xf32> to vector<8x8xbf16>
    %70 = vector.extract_strided_slice %11 {offsets = [0, 16], sizes = [8, 8], strides = [1, 1]} : vector<8x32xf32> to vector<8x8xf32>
    %71 = arith.truncf %70 : vector<8x8xf32> to vector<8x8xbf16>
    %72 = vector.extract_strided_slice %9 {offsets = [0, 16], sizes = [8, 8], strides = [1, 1]} : vector<8x32xf32> to vector<8x8xf32>
    %73 = arith.truncf %72 : vector<8x8xf32> to vector<8x8xbf16>
    %cst_28 = arith.constant dense<0.000000e+00> : vector<8x8xf32>
    %74 = tpu.matmul %69, %73, %cst_28 {dimension_numbers = #tpu.dot_dimension_numbers<[1], [0], [0], [1], [0, 0, 1, 1], [], []>} : vector<8x8xbf16>, vector<8x8xbf16>, vector<8x8xf32> -> vector<8x8xf32>
    %cst_29 = arith.constant 0.353553385 : f32
    %75 = vector.broadcast %cst_29 : f32 to vector<8x8xf32>
    %76 = arith.mulf %74, %75 : vector<8x8xf32>
    %cst_30 = arith.constant 1.000000e+09 : f32
    %77 = vector.broadcast %cst_30 : f32 to vector<8x8xf32>
    %78 = arith.subf %76, %77 : vector<8x8xf32>
    %79 = arith.select %17, %76, %78 : vector<8x8xi1>, vector<8x8xf32>
    %cst_31 = arith.constant dense<0xFF800000> : vector<8xf32>
    %80 = vector.multi_reduction <maximumf>, %79, %cst_31 [1] : vector<8x8xf32> to vector<8xf32>
    %81 = vector.shape_cast %80 : vector<8xf32> to vector<8x1xf32>
    %82 = vector.broadcast %81 : vector<8x1xf32> to vector<8x8xf32>
    %83 = arith.subf %79, %82 : vector<8x8xf32>
    %84 = math.exp %83 : vector<8x8xf32>
    %cst_32 = arith.constant dense<0.000000e+00> : vector<8xf32>
    %85 = vector.multi_reduction <add>, %84, %cst_32 [1] : vector<8x8xf32> to vector<8xf32>
    %86 = vector.shape_cast %85 : vector<8xf32> to vector<8x1xf32>
    %87 = tpu.reciprocal %86 {approx = true} : vector<8x1xf32> -> vector<8x1xf32>
    %88 = vector.broadcast %87 : vector<8x1xf32> to vector<8x8xf32>
    %89 = arith.mulf %84, %88 : vector<8x8xf32>
    %90 = arith.truncf %89 : vector<8x8xf32> to vector<8x8xbf16>
    %cst_33 = arith.constant dense<0.000000e+00> : vector<8x8xf32>
    %91 = tpu.matmul %90, %71, %cst_33 {dimension_numbers = #tpu.dot_dimension_numbers<[1], [0], [0], [1], [0, 0, 1, 1], [], []>} : vector<8x8xbf16>, vector<8x8xbf16>, vector<8x8xf32> -> vector<8x8xf32>
    %c0_34 = arith.constant 0 : index
    %c16 = arith.constant 16 : index
    %92 = vector.load %arg16[%c0_34, %c16] : memref<8x32xf32, #tpu.memory_space<vmem>>, vector<8x8xf32>
    tpu.vector_store %arg16[%c0_34, %c16], %91 {strides = array<i32>} : memref<8x32xf32, #tpu.memory_space<vmem>>, vector<8x8xf32>,
    %93 = vector.extract_strided_slice %7 {offsets = [0, 24], sizes = [8, 8], strides = [1, 1]} : vector<8x32xf32> to vector<8x8xf32>
    %94 = arith.truncf %93 : vector<8x8xf32> to vector<8x8xbf16>
    %95 = vector.extract_strided_slice %11 {offsets = [0, 24], sizes = [8, 8], strides = [1, 1]} : vector<8x32xf32> to vector<8x8xf32>
    %96 = arith.truncf %95 : vector<8x8xf32> to vector<8x8xbf16>
    %97 = vector.extract_strided_slice %9 {offsets = [0, 24], sizes = [8, 8], strides = [1, 1]} : vector<8x32xf32> to vector<8x8xf32>
    %98 = arith.truncf %97 : vector<8x8xf32> to vector<8x8xbf16>
    %cst_35 = arith.constant dense<0.000000e+00> : vector<8x8xf32>
    %99 = tpu.matmul %94, %98, %cst_35 {dimension_numbers = #tpu.dot_dimension_numbers<[1], [0], [0], [1], [0, 0, 1, 1], [], []>} : vector<8x8xbf16>, vector<8x8xbf16>, vector<8x8xf32> -> vector<8x8xf32>
    %cst_36 = arith.constant 0.353553385 : f32
    %100 = vector.broadcast %cst_36 : f32 to vector<8x8xf32>
    %101 = arith.mulf %99, %100 : vector<8x8xf32>
    %cst_37 = arith.constant 1.000000e+09 : f32
    %102 = vector.broadcast %cst_37 : f32 to vector<8x8xf32>
    %103 = arith.subf %101, %102 : vector<8x8xf32>
    %104 = arith.select %17, %101, %103 : vector<8x8xi1>, vector<8x8xf32>
    %cst_38 = arith.constant dense<0xFF800000> : vector<8xf32>
    %105 = vector.multi_reduction <maximumf>, %104, %cst_38 [1] : vector<8x8xf32> to vector<8xf32>
    %106 = vector.shape_cast %105 : vector<8xf32> to vector<8x1xf32>
    %107 = vector.broadcast %106 : vector<8x1xf32> to vector<8x8xf32>
    %108 = arith.subf %104, %107 : vector<8x8xf32>
    %109 = math.exp %108 : vector<8x8xf32>
    %cst_39 = arith.constant dense<0.000000e+00> : vector<8xf32>
    %110 = vector.multi_reduction <add>, %109, %cst_39 [1] : vector<8x8xf32> to vector<8xf32>
    %111 = vector.shape_cast %110 : vector<8xf32> to vector<8x1xf32>
    %112 = tpu.reciprocal %111 {approx = true} : vector<8x1xf32> -> vector<8x1xf32>
    %113 = vector.broadcast %112 : vector<8x1xf32> to vector<8x8xf32>
    %114 = arith.mulf %109, %113 : vector<8x8xf32>
    %115 = arith.truncf %114 : vector<8x8xf32> to vector<8x8xbf16>
    %cst_40 = arith.constant dense<0.000000e+00> : vector<8x8xf32>
    %116 = tpu.matmul %115, %96, %cst_40 {dimension_numbers = #tpu.dot_dimension_numbers<[1], [0], [0], [1], [0, 0, 1, 1], [], []>} : vector<8x8xbf16>, vector<8x8xbf16>, vector<8x8xf32> -> vector<8x8xf32>
    %c0_41 = arith.constant 0 : index
    %c24 = arith.constant 24 : index
    %117 = vector.load %arg16[%c0_41, %c24] : memref<8x32xf32, #tpu.memory_space<vmem>>, vector<8x8xf32>
    tpu.vector_store %arg16[%c0_41, %c24], %116 {strides = array<i32>} : memref<8x32xf32, #tpu.memory_space<vmem>>, vector<8x8xf32>,
    %c0_42 = arith.constant 0 : index
    %c0_43 = arith.constant 0 : index
    %118 = vector.load %arg16[%c0_42, %c0_43] : memref<8x32xf32, #tpu.memory_space<vmem>>, vector<8x32xf32>
    %119 = arith.truncf %118 : vector<8x32xf32> to vector<8x32xbf16>
    %c0_44 = arith.constant 0 : index
    %c0_45 = arith.constant 0 : index
    %120 = vector.load %arg7[%c0_44, %c0_45] : memref<32x32xbf16, #tpu.memory_space<vmem>>, vector<32x32xbf16>
    %cst_46 = arith.constant dense<0.000000e+00> : vector<8x32xf32>
    %121 = tpu.matmul %119, %120, %cst_46 {dimension_numbers = #tpu.dot_dimension_numbers<[1], [0], [0], [1], [0, 0, 1, 1], [], []>} : vector<8x32xbf16>, vector<32x32xbf16>, vector<8x32xf32> -> vector<8x32xf32>
    %c0_47 = arith.constant 0 : index
    %c0_48 = arith.constant 0 : index
    %122 = vector.load %arg8[%c0_47, %c0_48] : memref<1x32xf32, #tpu.memory_space<vmem>>, vector<1x32xf32>
    %123 = vector.broadcast %122 : vector<1x32xf32> to vector<8x32xf32>
    %124 = arith.addf %121, %123 : vector<8x32xf32>
    %c0_49 = arith.constant 0 : index
    %c0_50 = arith.constant 0 : index
    %125 = vector.load %arg9[%c0_49, %c0_50] : memref<1x32xf32, #tpu.memory_space<vmem>>, vector<1x32xf32>
    %c0_51 = arith.constant 0 : index
    %c0_52 = arith.constant 0 : index
    %126 = vector.load %arg10[%c0_51, %c0_52] : memref<1x32xf32, #tpu.memory_space<vmem>>, vector<1x32xf32>
    %cst_53 = arith.constant dense<0.000000e+00> : vector<8xf32>
    %127 = vector.multi_reduction <add>, %124, %cst_53 [1] : vector<8x32xf32> to vector<8xf32>
    %128 = vector.shape_cast %127 : vector<8xf32> to vector<8x1xf32>
    %cst_54 = arith.constant 3.200000e+01 : f32
    %129 = vector.broadcast %cst_54 : f32 to vector<8x1xf32>
    %130 = arith.divf %128, %129 : vector<8x1xf32>
    %131 = vector.broadcast %130 : vector<8x1xf32> to vector<8x32xf32>
    %132 = arith.subf %124, %131 : vector<8x32xf32>
    %133 = arith.mulf %132, %132 : vector<8x32xf32>
    %cst_55 = arith.constant dense<0.000000e+00> : vector<8xf32>
    %134 = vector.multi_reduction <add>, %133, %cst_55 [1] : vector<8x32xf32> to vector<8xf32>
    %135 = vector.shape_cast %134 : vector<8xf32> to vector<8x1xf32>
    %cst_56 = arith.constant 3.200000e+01 : f32
    %136 = vector.broadcast %cst_56 : f32 to vector<8x1xf32>
    %137 = arith.divf %135, %136 : vector<8x1xf32>
    %138 = vector.broadcast %130 : vector<8x1xf32> to vector<8x32xf32>
    %139 = arith.subf %124, %138 : vector<8x32xf32>
    %cst_57 = arith.constant 9.99999974E-6 : f32
    %140 = vector.broadcast %cst_57 : f32 to vector<8x1xf32>
    %141 = arith.addf %137, %140 : vector<8x1xf32>
    %142 = math.rsqrt %141 : vector<8x1xf32>
    %143 = vector.broadcast %142 : vector<8x1xf32> to vector<8x32xf32>
    %144 = arith.mulf %139, %143 : vector<8x32xf32>
    %145 = vector.broadcast %125 : vector<1x32xf32> to vector<8x32xf32>
    %146 = arith.mulf %144, %145 : vector<8x32xf32>
    %147 = vector.broadcast %126 : vector<1x32xf32> to vector<8x32xf32>
    %148 = arith.addf %146, %147 : vector<8x32xf32>
    %149 = arith.addf %1, %148 : vector<8x32xf32>
    %150 = arith.truncf %149 : vector<8x32xf32> to vector<8x32xbf16>
    %c0_58 = arith.constant 0 : index
    %c0_59 = arith.constant 0 : index
    %151 = vector.load %arg11[%c0_58, %c0_59] : memref<32x128xbf16, #tpu.memory_space<vmem>>, vector<32x128xbf16>
    %cst_60 = arith.constant dense<0.000000e+00> : vector<8x128xf32>
    %152 = tpu.matmul %150, %151, %cst_60 {dimension_numbers = #tpu.dot_dimension_numbers<[1], [0], [0], [1], [0, 0, 1, 1], [], []>} : vector<8x32xbf16>, vector<32x128xbf16>, vector<8x128xf32> -> vector<8x128xf32>
    %c0_61 = arith.constant 0 : index
    %c0_62 = arith.constant 0 : index
    %153 = vector.load %arg12[%c0_61, %c0_62] : memref<1x128xf32, #tpu.memory_space<vmem>>, vector<1x128xf32>
    %154 = vector.broadcast %153 : vector<1x128xf32> to vector<8x128xf32>
    %155 = arith.addf %152, %154 : vector<8x128xf32>
    %cst_63 = arith.constant 5.000000e-01 : f32
    %156 = vector.broadcast %cst_63 : f32 to vector<8x128xf32>
    %157 = arith.mulf %156, %155 : vector<8x128xf32>
    %cst_64 = arith.constant 0.707106769 : f32
    %158 = vector.broadcast %cst_64 : f32 to vector<8x128xf32>
    %159 = arith.mulf %155, %158 : vector<8x128xf32>
    %cst_65 = arith.constant 0.000000e+00 : f32
    %160 = vector.broadcast %cst_65 : f32 to vector<8x128xf32>
    %161 = arith.cmpf oge, %159, %160 : vector<8x128xf32>
    %cst_66 = arith.constant 1.000000e+00 : f32
    %cst_67 = arith.constant -1.000000e+00 : f32
    %162 = vector.broadcast %cst_66 : f32 to vector<8x128xf32>
    %163 = vector.broadcast %cst_67 : f32 to vector<8x128xf32>
    %164 = arith.select %161, %162, %163 : vector<8x128xi1>, vector<8x128xf32>
    %165 = math.absf %159 : vector<8x128xf32>
    %cst_68 = arith.constant 0.327591091 : f32
    %166 = vector.broadcast %cst_68 : f32 to vector<8x128xf32>
    %167 = arith.mulf %166, %165 : vector<8x128xf32>
    %cst_69 = arith.constant 1.000000e+00 : f32
    %168 = vector.broadcast %cst_69 : f32 to vector<8x128xf32>
    %169 = arith.addf %168, %167 : vector<8x128xf32>
    %cst_70 = arith.constant 1.000000e+00 : f32
    %170 = vector.broadcast %cst_70 : f32 to vector<8x128xf32>
    %171 = arith.divf %170, %169 : vector<8x128xf32>
    %cst_71 = arith.constant 1.06140542 : f32
    %172 = vector.broadcast %cst_71 : f32 to vector<8x128xf32>
    %173 = arith.mulf %172, %171 : vector<8x128xf32>
    %cst_72 = arith.constant -1.45315206 : f32
    %174 = vector.broadcast %cst_72 : f32 to vector<8x128xf32>
    %175 = arith.addf %173, %174 : vector<8x128xf32>
    %176 = arith.mulf %175, %171 : vector<8x128xf32>
    %cst_73 = arith.constant 1.42141378 : f32
    %177 = vector.broadcast %cst_73 : f32 to vector<8x128xf32>
    %178 = arith.addf %176, %177 : vector<8x128xf32>
    %179 = arith.mulf %178, %171 : vector<8x128xf32>
    %cst_74 = arith.constant -0.284496725 : f32
    %180 = vector.broadcast %cst_74 : f32 to vector<8x128xf32>
    %181 = arith.addf %179, %180 : vector<8x128xf32>
    %182 = arith.mulf %181, %171 : vector<8x128xf32>
    %cst_75 = arith.constant 0.254829586 : f32
    %183 = vector.broadcast %cst_75 : f32 to vector<8x128xf32>
    %184 = arith.addf %182, %183 : vector<8x128xf32>
    %185 = arith.mulf %184, %171 : vector<8x128xf32>
    %cst_76 = arith.constant 0.000000e+00 : f32
    %186 = vector.broadcast %cst_76 : f32 to vector<8x128xf32>
    %187 = arith.subf %186, %165 : vector<8x128xf32>
    %188 = arith.mulf %187, %165 : vector<8x128xf32>
    %189 = math.exp %188 : vector<8x128xf32>
    %190 = arith.mulf %185, %189 : vector<8x128xf32>
    %cst_77 = arith.constant 1.000000e+00 : f32
    %191 = vector.broadcast %cst_77 : f32 to vector<8x128xf32>
    %192 = arith.subf %191, %190 : vector<8x128xf32>
    %193 = arith.mulf %164, %192 : vector<8x128xf32>
    %cst_78 = arith.constant 1.000000e+00 : f32
    %194 = vector.broadcast %cst_78 : f32 to vector<8x128xf32>
    %195 = arith.addf %194, %193 : vector<8x128xf32>
    %196 = arith.mulf %157, %195 : vector<8x128xf32>
    %197 = arith.truncf %196 : vector<8x128xf32> to vector<8x128xbf16>
    %c0_79 = arith.constant 0 : index
    %c0_80 = arith.constant 0 : index
    %198 = vector.load %arg13[%c0_79, %c0_80] : memref<128x32xbf16, #tpu.memory_space<vmem>>, vector<128x32xbf16>
    %cst_81 = arith.constant dense<0.000000e+00> : vector<8x32xf32>
    %199 = tpu.matmul %197, %198, %cst_81 {dimension_numbers = #tpu.dot_dimension_numbers<[1], [0], [0], [1], [0, 0, 1, 1], [], []>} : vector<8x128xbf16>, vector<128x32xbf16>, vector<8x32xf32> -> vector<8x32xf32>
    %c0_82 = arith.constant 0 : index
    %c0_83 = arith.constant 0 : index
    %200 = vector.load %arg14[%c0_82, %c0_83] : memref<1x32xf32, #tpu.memory_space<vmem>>, vector<1x32xf32>
    %201 = vector.broadcast %200 : vector<1x32xf32> to vector<8x32xf32>
    %202 = arith.addf %199, %201 : vector<8x32xf32>
    %cst_84 = arith.constant dense<0.000000e+00> : vector<8xf32>
    %203 = vector.multi_reduction <add>, %202, %cst_84 [1] : vector<8x32xf32> to vector<8xf32>
    %204 = vector.shape_cast %203 : vector<8xf32> to vector<8x1xf32>
    %cst_85 = arith.constant 3.200000e+01 : f32
    %205 = vector.broadcast %cst_85 : f32 to vector<8x1xf32>
    %206 = arith.divf %204, %205 : vector<8x1xf32>
    %207 = vector.broadcast %206 : vector<8x1xf32> to vector<8x32xf32>
    %208 = arith.subf %202, %207 : vector<8x32xf32>
    %209 = arith.mulf %208, %208 : vector<8x32xf32>
    %cst_86 = arith.constant dense<0.000000e+00> : vector<8xf32>
    %210 = vector.multi_reduction <add>, %209, %cst_86 [1] : vector<8x32xf32> to vector<8xf32>
    %211 = vector.shape_cast %210 : vector<8xf32> to vector<8x1xf32>
    %cst_87 = arith.constant 3.200000e+01 : f32
    %212 = vector.broadcast %cst_87 : f32 to vector<8x1xf32>
    %213 = arith.divf %211, %212 : vector<8x1xf32>
    %214 = vector.broadcast %206 : vector<8x1xf32> to vector<8x32xf32>
    %215 = arith.subf %202, %214 : vector<8x32xf32>
    %cst_88 = arith.constant 9.99999974E-6 : f32
    %216 = vector.broadcast %cst_88 : f32 to vector<8x1xf32>
    %217 = arith.addf %213, %216 : vector<8x1xf32>
    %218 = math.rsqrt %217 : vector<8x1xf32>
    %219 = vector.broadcast %218 : vector<8x1xf32> to vector<8x32xf32>
    %220 = arith.mulf %215, %219 : vector<8x32xf32>
    %221 = vector.broadcast %125 : vector<1x32xf32> to vector<8x32xf32>
    %222 = arith.mulf %220, %221 : vector<8x32xf32>
    %223 = vector.broadcast %126 : vector<1x32xf32> to vector<8x32xf32>
    %224 = arith.addf %222, %223 : vector<8x32xf32>
    %225 = arith.addf %149, %224 : vector<8x32xf32>
    %c0_89 = arith.constant 0 : index
    %c0_90 = arith.constant 0 : index
    %c0_91 = arith.constant 0 : index
    %226 = vector.load %arg15[%c0_89, %c0_90, %c0_91] : memref<1x8x32xf32, #tpu.memory_space<vmem>>, vector<1x8x32xf32>
    %227 = vector.shape_cast %226 : vector<1x8x32xf32> to vector<8x32xf32>
    %228 = vector.shape_cast %225 : vector<8x32xf32> to vector<1x8x32xf32>
    tpu.vector_store %arg15[%c0_89, %c0_90, %c0_91], %228 {strides = array<i32>} : memref<1x8x32xf32, #tpu.memory_space<vmem>>, vector<1x8x32xf32>,
    return
  }
  func.func @transform_0(%arg0: i32, %arg1: i32) -> (i32, i32, i32) {
    %c0_i32 = arith.constant 0 : i32
    %c0_i32_0 = arith.constant 0 : i32
    return %arg0, %arg1, %c0_i32 : i32, i32, i32
  }
  func.func @transform_1(%arg0: i32, %arg1: i32) -> (i32, i32, i32) {
    %c0_i32 = arith.constant 0 : i32
    %c0_i32_0 = arith.constant 0 : i32
    %c0_i32_1 = arith.constant 0 : i32
    return %arg0, %c0_i32, %c0_i32_0 : i32, i32, i32
  }
  func.func @transform_2(%arg0: i32, %arg1: i32) -> (i32, i32) {
    %c0_i32 = arith.constant 0 : i32
    %c0_i32_0 = arith.constant 0 : i32
    %c0_i32_1 = arith.constant 0 : i32
    return %c0_i32, %c0_i32_0 : i32, i32
  }
  func.func @transform_3(%arg0: i32, %arg1: i32) -> (i32, i32) {
    %c0_i32 = arith.constant 0 : i32
    %c0_i32_0 = arith.constant 0 : i32
    %c0_i32_1 = arith.constant 0 : i32
    return %c0_i32, %c0_i32_0 : i32, i32
  }
  func.func @transform_4(%arg0: i32, %arg1: i32) -> (i32, i32) {
    %c0_i32 = arith.constant 0 : i32
    %c0_i32_0 = arith.constant 0 : i32
    %c0_i32_1 = arith.constant 0 : i32
    return %c0_i32, %c0_i32_0 : i32, i32
  }
  func.func @transform_5(%arg0: i32, %arg1: i32) -> (i32, i32) {
    %c0_i32 = arith.constant 0 : i32
    %c0_i32_0 = arith.constant 0 : i32
    %c0_i32_1 = arith.constant 0 : i32
    return %c0_i32, %c0_i32_0 : i32, i32
  }
  func.func @transform_6(%arg0: i32, %arg1: i32) -> (i32, i32) {
    %c0_i32 = arith.constant 0 : i32
    %c0_i32_0 = arith.constant 0 : i32
    %c0_i32_1 = arith.constant 0 : i32
    return %c0_i32, %c0_i32_0 : i32, i32
  }
  func.func @transform_7(%arg0: i32, %arg1: i32) -> (i32, i32) {
    %c0_i32 = arith.constant 0 : i32
    %c0_i32_0 = arith.constant 0 : i32
    %c0_i32_1 = arith.constant 0 : i32
    return %c0_i32, %c0_i32_0 : i32, i32
  }
  func.func @transform_8(%arg0: i32, %arg1: i32) -> (i32, i32) {
    %c0_i32 = arith.constant 0 : i32
    %c0_i32_0 = arith.constant 0 : i32
    %c0_i32_1 = arith.constant 0 : i32
    return %c0_i32, %c0_i32_0 : i32, i32
  }
  func.func @transform_9(%arg0: i32, %arg1: i32) -> (i32, i32) {
    %c0_i32 = arith.constant 0 : i32
    %c0_i32_0 = arith.constant 0 : i32
    %c0_i32_1 = arith.constant 0 : i32
    return %c0_i32, %c0_i32_0 : i32, i32
  }
  func.func @transform_10(%arg0: i32, %arg1: i32) -> (i32, i32) {
    %c0_i32 = arith.constant 0 : i32
    %c0_i32_0 = arith.constant 0 : i32
    %c0_i32_1 = arith.constant 0 : i32
    return %c0_i32, %c0_i32_0 : i32, i32
  }
  func.func @transform_11(%arg0: i32, %arg1: i32) -> (i32, i32) {
    %c0_i32 = arith.constant 0 : i32
    %c0_i32_0 = arith.constant 0 : i32
    %c0_i32_1 = arith.constant 0 : i32
    return %c0_i32, %c0_i32_0 : i32, i32
  }
  func.func @transform_12(%arg0: i32, %arg1: i32) -> (i32, i32) {
    %c0_i32 = arith.constant 0 : i32
    %c0_i32_0 = arith.constant 0 : i32
    %c0_i32_1 = arith.constant 0 : i32
    return %c0_i32, %c0_i32_0 : i32, i32
  }
  func.func @transform_13(%arg0: i32, %arg1: i32) -> (i32, i32, i32) {
    %c0_i32 = arith.constant 0 : i32
    %c0_i32_0 = arith.constant 0 : i32
    return %arg0, %arg1, %c0_i32 : i32, i32, i32
  }
}

</mosaic_0001>

<llo_original>
// kernel: transformer_forward.5
$region0: #{transformer_forward.5}
  #allocation0 [shape = 'u32[]', space=smem, size = 0x4, offset = 0x4, fixed_abs, tag = 'smem constant byte address 0x4 - core index']
  #allocation1 [shape = 'u32[72,128]{1,0:T(1,128)}', space=vmem, size = 0x9000, scoped, tag = 'internal scratch']
  %s0 = inlined_call_operand.vmem [shape: f32[2,8,32], index: 0, kind: input, shape index: {}]
  %s1 = inlined_call_operand.vmem [shape: f32[1,32], index: 1, kind: input, shape index: {}]
  %s2 = inlined_call_operand.vmem [shape: f32[1,32], index: 2, kind: input, shape index: {}]
  %s3 = inlined_call_operand.vmem [shape: bf16[32,512], index: 3, kind: input, shape index: {}]
  %s4 = inlined_call_operand.vmem [shape: f32[1,512], index: 4, kind: input, shape index: {}]
  %s5 = inlined_call_operand.hbm [shape: f32[2,8,512], index: 5, kind: output, shape index: {}]
  %s6 = sld [smem:[#allocation0]]
  $region91: #{transformer_forward.5} parent=0
    _
  %s8 = ssub.s32 1, %s6
  %s9 = scalar_select 0, %s8, %s6
  $region1: #{transformer_forward.5} parent=0
    #allocation2 [shape = 'u8[32768]{0}', space=vmem, size = 0x8000, scoped, tag = 'input window, operand 3']
    #allocation3 [shape = 'u8[16384]{0}', space=vmem, size = 0x4000, scoped, tag = 'output window, operand 0']
    #allocation4 [shape = 's32[2]{0}', space=sflag, size = 0x8, scoped, tag = 'scoped memory for transformer_forward.5']
    %10 = vsyncpa [#allocation4], 0
    %s11 = scalar_lea.sflag [#allocation4], 1
    %12 = vsyncpa %s11, 0
    loop: start=0, step=1, limit=6
    $region2: #{transformer_forward.5} parent=1 // loop_pre_header
      _
    $region3: #{transformer_forward.5} parent=1 // loop_header
      %s14 = sphi 0, %s18
      %p15 = scmp.ge.s32.totalorder %s14, 6
      %s21 = sphi 0, %s40
      %s22 = sphi 0, %s36
      %s23 = sphi 0, %s32
      %s24 = sphi 0, %s21
      %s25 = sphi 0, %s22
      %s26 = sphi 0, %s23
      %s27 = sphi 0, %s24
      %s28 = sphi 0, %s25
      %s29 = sphi 0, %s26
      %s45 = sphi 0, %s47
      %s48 = sphi 0, %s45
      %s49 = sphi 0, %s48
      %s65 = sphi 0, %s49
      %s69 = sphi 0, %s69
      %s71 = sphi 0, %s69
      %s72 = sphi 0, %s71
      %s86 = sphi 0, %s72
      %s90 = sphi 0, %s90
      %s92 = sphi 0, %s90
      %s93 = sphi 0, %s92
      %s107 = sphi 0, %s93
      %s113 = sphi 0, %s115
      %s116 = sphi 0, %s113
      %s117 = sphi 0, %s116
      %s133 = sphi 0, %s117
      %s139 = sphi 0, %s141
      %s142 = sphi 0, %s139
      %s143 = sphi 0, %s142
      %s159 = sphi 0, %s143
      %s169 = sphi 0, %s171
      %s172 = sphi 0, %s169
      %s173 = sphi 0, %s172
      %s189 = sphi 0, %s173
    $region4: #{transformer_forward.5} parent=1 // loop_header_branch
      %17 = sbr.rel (%p15) target = $region8
    $region5: #{transformer_forward.5} parent=1 // loop_body
      %s19 = ssub.s32 %s14, 1
      %s20 = ssub.s32 %s14, 2
      %s30 = sadd.s32 1, %s23
      %p31 = scmp.ge.s32.totalorder %s30, 2
      %s32 = scalar_select %p31, 0, %s30
      %s33 = sadd.s32 1, %s22
      %s34 = scalar_select %p31, %s33, %s22
      %p35 = scmp.ge.s32.totalorder %s34, 1
      %s36 = scalar_select %p35, 0, %s34
      %s37 = sadd.s32 1, %s21
      %s38 = scalar_select %p35, %s37, %s21
      %p39 = scmp.ge.s32.totalorder %s38, 2
      %s40 = scalar_select %p39, 0, %s38
      %s41 = ssub.s32 %s21, %s40
      %s42 = ssub.s32 %s22, %s36
      %s43 = sor.u32 %s41, %s42
      %p44 = scmp.eq.s32.totalorder %s43, 0
      %s46 = sadd.s32 %s45, 1
      %s47 = scalar_select %p44, %s45, %s46
      %p50 = pneg %p44
      %p51 = scmp.eq.s32.totalorder %s14, 3
      %p52 = por %p50, %p51
      %p53 = scmp.ne.s32.totalorder %s45, %s48
      %p54 = scmp.eq.s32.totalorder %s14, 0
      %p55 = por %p53, %p54
      %p56 = scmp.ne.s32.totalorder %s45, %s48
      %p57 = scmp.eq.s32.totalorder %s19, 3
      %p58 = por %p56, %p57
      %p59 = scmp.ne.s32.totalorder %s48, %s49
      %p60 = scmp.eq.s32.totalorder %s19, 0
      %p61 = por %p59, %p60
      %p62 = scmp.ne.s32.totalorder %s48, %s49
      %p63 = scmp.eq.s32.totalorder %s20, 3
      %p64 = por %p62, %p63
      %p66 = scmp.ne.s32.totalorder %s49, %s65
      %p67 = scmp.eq.s32.totalorder %s20, 0
      %p68 = por %p66, %p67
      %s70 = sadd.s32 %s69, 1
      %p73 = scmp.eq.s32.totalorder %s14, 3
      %p74 = scmp.ne.s32.totalorder %s69, %s71
      %p75 = scmp.eq.s32.totalorder %s14, 0
      %p76 = por %p74, %p75
      %p77 = scmp.ne.s32.totalorder %s69, %s71
      %p78 = scmp.eq.s32.totalorder %s19, 3
      %p79 = por %p77, %p78
      %p80 = scmp.ne.s32.totalorder %s71, %s72
      %p81 = scmp.eq.s32.totalorder %s19, 0
      %p82 = por %p80, %p81
      %p83 = scmp.ne.s32.totalorder %s71, %s72
      %p84 = scmp.eq.s32.totalorder %s20, 3
      %p85 = por %p83, %p84
      %p87 = scmp.ne.s32.totalorder %s72, %s86
      %p88 = scmp.eq.s32.totalorder %s20, 0
      %p89 = por %p87, %p88
      %s91 = sadd.s32 %s90, 1
      %p94 = scmp.eq.s32.totalorder %s14, 3
      %p95 = scmp.ne.s32.totalorder %s90, %s92
      %p96 = scmp.eq.s32.totalorder %s14, 0
      %p97 = por %p95, %p96
      %p98 = scmp.ne.s32.totalorder %s90, %s92
      %p99 = scmp.eq.s32.totalorder %s19, 3
      %p100 = por %p98, %p99
      %p101 = scmp.ne.s32.totalorder %s92, %s93
      %p102 = scmp.eq.s32.totalorder %s19, 0
      %p103 = por %p101, %p102
      %p104 = scmp.ne.s32.totalorder %s92, %s93
      %p105 = scmp.eq.s32.totalorder %s20, 3
      %p106 = por %p104, %p105
      %p108 = scmp.ne.s32.totalorder %s93, %s107
      %p109 = scmp.eq.s32.totalorder %s20, 0
      %p110 = por %p108, %p109
      %s111 = ssub.s32 %s23, %s32
      %p112 = scmp.eq.s32.totalorder %s111, 0
      %s114 = sadd.s32 %s113, 1
      %s115 = scalar_select %p112, %s113, %s114
      %p118 = pneg %p112
      %p119 = scmp.eq.s32.totalorder %s14, 3
      %p120 = por %p118, %p119
      %p121 = scmp.ne.s32.totalorder %s113, %s116
      %p122 = scmp.eq.s32.totalorder %s14, 0
      %p123 = por %p121, %p122
      %p124 = scmp.ne.s32.totalorder %s113, %s116
      %p125 = scmp.eq.s32.totalorder %s19, 3
      %p126 = por %p124, %p125
      %p127 = scmp.ne.s32.totalorder %s116, %s117
      %p128 = scmp.eq.s32.totalorder %s19, 0
      %p129 = por %p127, %p128
      %p130 = scmp.ne.s32.totalorder %s116, %s117
      %p131 = scmp.eq.s32.totalorder %s20, 3
      %p132 = por %p130, %p131
      %p134 = scmp.ne.s32.totalorder %s117, %s133
      %p135 = scmp.eq.s32.totalorder %s20, 0
      %p136 = por %p134, %p135
      %s137 = ssub.s32 %s23, %s32
      %p138 = scmp.eq.s32.totalorder %s137, 0
      %s140 = sadd.s32 %s139, 1
      %s141 = scalar_select %p138, %s139, %s140
      %p144 = pneg %p138
      %p145 = scmp.eq.s32.totalorder %s14, 3
      %p146 = por %p144, %p145
      %p147 = scmp.ne.s32.totalorder %s139, %s142
      %p148 = scmp.eq.s32.totalorder %s14, 0
      %p149 = por %p147, %p148
      %p150 = scmp.ne.s32.totalorder %s139, %s142
      %p151 = scmp.eq.s32.totalorder %s19, 3
      %p152 = por %p150, %p151
      %p153 = scmp.ne.s32.totalorder %s142, %s143
      %p154 = scmp.eq.s32.totalorder %s19, 0
      %p155 = por %p153, %p154
      %p156 = scmp.ne.s32.totalorder %s142, %s143
      %p157 = scmp.eq.s32.totalorder %s20, 3
      %p158 = por %p156, %p157
      %p160 = scmp.ne.s32.totalorder %s143, %s159
      %p161 = scmp.eq.s32.totalorder %s20, 0
      %p162 = por %p160, %p161
      %s163 = ssub.s32 %s21, %s40
      %s164 = ssub.s32 %s22, %s36
      %s165 = sor.u32 %s163, %s164
      %s166 = ssub.s32 %s23, %s32
      %s167 = sor.u32 %s165, %s166
      %p168 = scmp.eq.s32.totalorder %s167, 0
      %s170 = sadd.s32 %s169, 1
      %s171 = scalar_select %p168, %s169, %s170
      %p174 = pneg %p168
      %p175 = scmp.eq.s32.totalorder %s14, 3
      %p176 = por %p174, %p175
      %p177 = scmp.ne.s32.totalorder %s169, %s172
      %p178 = scmp.eq.s32.totalorder %s14, 0
      %p179 = por %p177, %p178
      %p180 = scmp.ne.s32.totalorder %s169, %s172
      %p181 = scmp.eq.s32.totalorder %s19, 3
      %p182 = por %p180, %p181
      %p183 = scmp.ne.s32.totalorder %s172, %s173
      %p184 = scmp.eq.s32.totalorder %s19, 0
      %p185 = por %p183, %p184
      %p186 = scmp.ne.s32.totalorder %s172, %s173
      %p187 = scmp.eq.s32.totalorder %s20, 3
      %p188 = por %p186, %p187
      %p190 = scmp.ne.s32.totalorder %s173, %s189
      %p191 = scmp.eq.s32.totalorder %s20, 0
      %p192 = por %p190, %p191
      %p193 = scmp.le.s32.totalorder 1, %s14
      %p194 = scmp.lt.s32.totalorder %s14, 5
      %p195 = pnand %p193, %p194
      %p196 = pneg %p195
      // Predicated region
      $region9: #{transformer_forward.5} parent=5 // pred_check
        _
      $region10: #{transformer_forward.5} parent=5 // pred_check_branch
        %198 = sbr.rel (%p195) target = $region12
      $region11: #{transformer_forward.5} parent=5 // pred_region
        %s199 = ssub.s32 %s14, 1
        // Predicated region
        $region13: #{transformer_forward.5} parent=11 // pred_check
          %p200 = pneg %p82
        $region14: #{transformer_forward.5} parent=11 // pred_check_branch
          %202 = sbr.rel (%p200) target = $region16
        $region15: #{transformer_forward.5} parent=11 // pred_region
          _
        $region16: #{transformer_forward.5} parent=11 // pred_fallthru
          _
        // Predicated region
        $region17: #{transformer_forward.5} parent=11 // pred_check
          %p203 = pneg %p103
        $region18: #{transformer_forward.5} parent=11 // pred_check_branch
          %205 = sbr.rel (%p203) target = $region20
        $region19: #{transformer_forward.5} parent=11 // pred_region
          _
        $region20: #{transformer_forward.5} parent=11 // pred_fallthru
          _
      $region12: #{transformer_forward.5} parent=5 // pred_fallthru
        _
      %p206 = scmp.lt.s32.totalorder %s14, 4
      // Predicated region
      $region21: #{transformer_forward.5} parent=5 // pred_check
        %p207 = pneg %p206
      $region22: #{transformer_forward.5} parent=5 // pred_check_branch
        %209 = sbr.rel (%p207) target = $region24
      $region23: #{transformer_forward.5} parent=5 // pred_region
        // Predicated region
        $region25: #{transformer_forward.5} parent=23 // pred_check
          %p210 = pneg %p55
        $region26: #{transformer_forward.5} parent=23 // pred_check_branch
          %212 = sbr.rel (%p210) target = $region28
        $region27: #{transformer_forward.5} parent=23 // pred_region
          %p213 = scmp.lt.s32.totalorder %s21, 1
          %s214 = scalar_select %p213, %s21, 1
          %p215 = scmp.lt.s32.totalorder %s22, 0
          %s216 = scalar_select %p215, %s22, 0
          %s217 = sadd.s32 %s216, %s214
          %s218 = smul.addr %s217, 8
          %s219 = scalar_lea.vmem %s0, %s218
        $region28: #{transformer_forward.5} parent=23 // pred_fallthru
          _
        // Predicated region
        $region29: #{transformer_forward.5} parent=23 // pred_check
          %p220 = pneg %p123
        $region30: #{transformer_forward.5} parent=23 // pred_check_branch
          %222 = sbr.rel (%p220) target = $region32
        $region31: #{transformer_forward.5} parent=23 // pred_region
          %s223 = sand.u32 %s113, 1
          %s224 = sand.u32 %s113, 1
          %s225 = smul.addr %s224, 32
          %s226 = scalar_lea.vmem [#allocation2], %s225
          %s227 = smul.u32 2, %s23
          %s228 = smul.addr %s227, 4
          %s229 = scalar_lea.vmem %s3, %s228
          // Predicated region
          $region33: #{transformer_forward.5} parent=31 // pred_check
            _
          $region34: #{transformer_forward.5} parent=31 // pred_check_branch
            %231 = sbr.rel (0) target = $region36
          $region35: #{transformer_forward.5} parent=31 // pred_region
            // Predicated region
            $region37: #{transformer_forward.5} parent=35 // pred_check
              _
            $region38: #{transformer_forward.5} parent=35 // pred_check_branch
              %233 = sbr.rel (0) target = $region40
            $region39: #{transformer_forward.5} parent=35 // pred_region
              // Predicated region
              $region52: #{transformer_forward.5} parent=39 // pred_check
                _
              $region53: #{transformer_forward.5} parent=39 // pred_check_branch
                %255 = sbr.rel (0) target = $region55
              $region54: #{transformer_forward.5} parent=39 // pred_region
                loop: start=0, step=1, limit=1
                $region56: #{transformer_forward.5} parent=54 // loop_pre_header
                  _
                $region57: #{transformer_forward.5} parent=54 // loop_header
                  %s257 = sphi 0, %s261
                  %p258 = scmp.ge.s32.totalorder %s257, 1
                  %s262 = sphi %s229, %s229
                  %s263 = sphi %s226, %s226
                $region58: #{transformer_forward.5} parent=54 // loop_header_branch
                  %260 = sbr.rel (%p258) target = $region62
                $region59: #{transformer_forward.5} parent=54 // loop_body
                  %v264 = vld [vmem:[%s262] sm:$0xff]
                  %265 = vst [vmem:[%s263] sm:$0xff] %v264
                  %v266 = vld [vmem:[%s262 + $0x10] sm:$0xff]
                  %267 = vst [vmem:[%s263 + $0x8] sm:$0xff] %v266
                  %v268 = vld [vmem:[%s262 + $0x20] sm:$0xff]
                  %269 = vst [vmem:[%s263 + $0x10] sm:$0xff] %v268
                  %v270 = vld [vmem:[%s262 + $0x30] sm:$0xff]
                  %271 = vst [vmem:[%s263 + $0x18] sm:$0xff] %v270
                $region60: #{transformer_forward.5} parent=54 // loop_footer
                  %s261 = sadd.s32 1, %s257
                $region61: #{transformer_forward.5} parent=54 // loop_footer_branch
                  %256 = sbr.rel target = $region57
                $region62: #{transformer_forward.5} parent=54 // loop_exit
                  _
              $region55: #{transformer_forward.5} parent=39 // pred_fallthru
                _
              // Predicated region
              $region63: #{transformer_forward.5} parent=39 // pred_check
                _
              $region64: #{transformer_forward.5} parent=39 // pred_check_branch
                %273 = sbr.rel target = $region66
              $region65: #{transformer_forward.5} parent=39 // pred_region
                _
              $region66: #{transformer_forward.5} parent=39 // pred_fallthru
                _
            $region40: #{transformer_forward.5} parent=35 // pred_fallthru
              _
            // Predicated region
            $region41: #{transformer_forward.5} parent=35 // pred_check
              _
            $region42: #{transformer_forward.5} parent=35 // pred_check_branch
              %235 = sbr.rel target = $region44
            $region43: #{transformer_forward.5} parent=35 // pred_region
              %s237 = ssub.s32 256, 1
              loop: start=0, step=1, limit=1
              $region45: #{transformer_forward.5} parent=43 // loop_pre_header
                _
              $region46: #{transformer_forward.5} parent=43 // loop_header
                %s239 = sphi 0, %s243
                %p240 = scmp.ge.s32.totalorder %s239, 1
                %s244 = sphi %s229, %s229
                %s245 = sphi %s226, %s226
              $region47: #{transformer_forward.5} parent=43 // loop_header_branch
                %242 = sbr.rel (%p240) target = $region51
              $region48: #{transformer_forward.5} parent=43 // loop_body
                %v246 = vld [vmem:[%s244] sm:%s237]
                %247 = vst [vmem:[%s245] sm:%s237] %v246
                %v248 = vld [vmem:[%s244 + $0x10] sm:%s237]
                %249 = vst [vmem:[%s245 + $0x8] sm:%s237] %v248
                %v250 = vld [vmem:[%s244 + $0x20] sm:%s237]
                %251 = vst [vmem:[%s245 + $0x10] sm:%s237] %v250
                %v252 = vld [vmem:[%s244 + $0x30] sm:%s237]
                %253 = vst [vmem:[%s245 + $0x18] sm:%s237] %v252
              $region49: #{transformer_forward.5} parent=43 // loop_footer
                %s243 = sadd.s32 1, %s239
              $region50: #{transformer_forward.5} parent=43 // loop_footer_branch
                %238 = sbr.rel target = $region46
              $region51: #{transformer_forward.5} parent=43 // loop_exit
                _
            $region44: #{transformer_forward.5} parent=35 // pred_fallthru
              _
          $region36: #{transformer_forward.5} parent=31 // pred_fallthru
            _
          %274 = vnop
        $region32: #{transformer_forward.5} parent=23 // pred_fallthru
          _
        // Predicated region
        $region67: #{transformer_forward.5} parent=23 // pred_check
          %p275 = pneg %p149
        $region68: #{transformer_forward.5} parent=23 // pred_check_branch
          %277 = sbr.rel (%p275) target = $region70
        $region69: #{transformer_forward.5} parent=23 // pred_region
          %s278 = smul.u32 2, %s23
          %p279 = scmp.lt.s32.totalorder %s278, 3
          %s280 = scalar_select %p279, %s278, 3
          %s281 = scalar_lea.vmem %s4, %s280
          %s282 = smul.u32 2, %s23
        $region70: #{transformer_forward.5} parent=23 // pred_fallthru
          _
      $region24: #{transformer_forward.5} parent=5 // pred_fallthru
        _
      %p283 = scmp.le.s32.totalorder 1, %s14
      %p284 = scmp.lt.s32.totalorder %s14, 5
      %p285 = pnand %p283, %p284
      %p286 = pneg %p285
      // Predicated region
      $region71: #{transformer_forward.5} parent=5 // pred_check
        _
      $region72: #{transformer_forward.5} parent=5 // pred_check_branch
        %288 = sbr.rel (%p285) target = $region74
      $region73: #{transformer_forward.5} parent=5 // pred_region
        %s289 = ssub.s32 %s14, 1
        %s290 = sand.u32 %s116, 1
        %s291 = sand.u32 %s116, 1
        %s292 = smul.addr %s291, 32
        %s293 = scalar_lea.vmem [#allocation2], %s292
        // Predicated region
        $region75: #{transformer_forward.5} parent=73 // pred_check
          %p294 = pneg %p129
        $region76: #{transformer_forward.5} parent=73 // pred_check_branch
          %296 = sbr.rel (%p294) target = $region78
        $region77: #{transformer_forward.5} parent=73 // pred_region
          _
        $region78: #{transformer_forward.5} parent=73 // pred_fallthru
          _
        %p297 = scmp.lt.s32.totalorder %s24, 1
        %s298 = scalar_select %p297, %s24, 1
        %p299 = scmp.lt.s32.totalorder %s25, 0
        %s300 = scalar_select %p299, %s25, 0
        %s301 = sadd.s32 %s300, %s298
        %s302 = smul.addr %s301, 8
        %s303 = scalar_lea.vmem %s0, %s302
        %p304 = pneg %p61
        %p305 = pneg %p58
        %p306 = pneg %p82
        %p307 = pneg %p79
        %p308 = pneg %p103
        %p309 = pneg %p100
        %s310 = sand.u32 %s116, 1
        %s311 = sand.u32 %s116, 1
        %s312 = smul.addr %s311, 32
        %s313 = scalar_lea.vmem [#allocation2], %s312
        %p314 = pneg %p129
        %p315 = pneg %p126
        %s316 = smul.u32 2, %s26
        %p317 = scmp.lt.s32.totalorder %s316, 3
        %s318 = scalar_select %p317, %s316, 3
        %s319 = scalar_lea.vmem %s4, %s318
        %p320 = pneg %p155
        %p321 = pneg %p152
        %p322 = pneg %p185
        %p323 = pneg %p182
        %s324 = sand.u32 %s172, 1
        %s325 = scalar_lea.sflag [#allocation4], %s324
        %s326 = sand.u32 %s172, 1
        %s327 = smul.addr %s326, 16
        %s328 = scalar_lea.vmem [#allocation3], %s327
        %p329 = scmp.lt.s32.totalorder %s24, 1
        %s330 = scalar_select %p329, %s24, 1
        %p331 = scmp.lt.s32.totalorder %s25, 0
        %s332 = scalar_select %p331, %s25, 0
        %s333 = sadd.s32 %s332, %s330
        %s334 = smul.addr %s333, 8
        %s335 = scalar_lea.vmem %s0, %s334
        %s336 = smul.u32 2, %s26
        %s337 = smul.u32 2, %s26
        %p338 = scmp.lt.s32.totalorder %s337, 3
        %s339 = scalar_select %p338, %s337, 3
        %s340 = scalar_lea.vmem %s4, %s339
        %s341 = smul.u32 2, %s26
        %s342 = smul.u32 2, %s26
        %v344 = vld [vmem:[%s335] sm:$0xff]
        %v345 = vld [vmem:[%s1] sm:$0x1]
        %v346 = vld [vmem:[%s2] sm:$0x1]
        %vm347 = vcmask 261120
        %v348 = vsel %vm347, %v344, 0.0
        %349 = vadd.xlane.f32.xlu0 %v348
        %v350 = vpop.xlane.xlu0 %349
        %v351 = vrcp.pop 32.0
        %v352 = vmul.f32 32.0, %v351
        %v353 = vsub.f32 1.0, %v352
        %v354 = vmul.f32 %v351, %v353
        %v355 = vadd.f32 %v351, %v354
        %vm356 = vweird.f32 %v351
        %v357 = vsel %vm356, %v351, %v355
        %v358 = vmul.f32 %v350, %v357
        %v359 = vsub.f32 %v344, %v358
        %v360 = vmul.f32 %v359, %v359
        %v361 = vsel %vm347, %v360, 0.0
        %362 = vadd.xlane.f32.xlu0 %v361
        %v363 = vpop.xlane.xlu0 %362
        %v364 = vmul.f32 %v363, %v357
        %v365 = vadd.f32 %v364, 1e-05
        %v366 = vrsqrt.pop %v365
        %v367 = vmul.f32 %v366, %v365
        %v368 = vmul.f32 %v367, %v366
        %v369 = vmul.f32 0.5, %v368
        %v370 = vsub.f32 1.5, %v369
        %v371 = vmul.f32 %v366, %v370
        %vm372 = vweird.f32 %v365
        %vm373 = vweird.f32 %v366
        %vm374 = vmor %vm372, %vm373
        %v375 = vsel %vm374, %v366, %v371
        %v376 = vmul.f32 %v359, %v375
        %v378 = vperm.slane %v345, 0
        %v380 = vmul.f32 %v376, %v378
        %v382 = vperm.slane %v346, 0
        %v384 = vadd.f32 %v380, %v382
        %v385 = vpack.c.bf16 %v384, %v384
        %v386 = vld [vmem:[%s293] sm:$0xff]
        %v387 = vld [vmem:[%s293 + $0x8] sm:$0xff]
        %v388 = vld [vmem:[%s293 + $0x10] sm:$0xff]
        %v389 = vld [vmem:[%s293 + $0x18] sm:$0xff]
        %v390 = vld [vmem:[%s340] sm:$0x3]
        %v392 = vperm.slane %v390, 0
        %v393 = vperm.slane %v390, 1
        %v400 = vunpack.c.l.b16 %v386
        %v401 = vunpack.c.h.b16 %v386
        %v402 = vunpack.c.l.b16 %v387
        %v403 = vunpack.c.h.b16 %v387
        %v404 = vunpack.c.l.b16 %v388
        %v405 = vunpack.c.h.b16 %v388
        %v406 = vunpack.c.l.b16 %v389
        %v407 = vunpack.c.h.b16 %v389
        %v408 = vpack.c.b16 %v402, %v400
        %v409 = vpack.c.b16 %v403, %v401
        %v410 = vpack.c.b16 %v406, %v404
        %v411 = vpack.c.b16 %v407, %v405
        %v417 = vsel %vm347, %v385, 0
        %419 = vmatpush.bf16.msra.mxu0 0
        %420 = vmatpush.bf16.msra.mxu0 0
        %421 = vmatpush.bf16.msra.mxu0 0
        %422 = vmatpush.bf16.msra.mxu0 0
        %423 = vmatpush.bf16.msra.mxu0 0
        %424 = vmatpush.bf16.msra.mxu0 0
        %425 = vmatpush.bf16.msra.mxu0 %v410
        %426 = vmatpush.bf16.msra.mxu0 %v408
        %427 = vmatmul.bf16.gmra.mxu0 %v417
        %v428 = vpop.f32.mrf.mxu0
        %v429 = vadd.f32 %v392, %v428
        %v430 = vpop.f32.mrf.mxu0
        %431 = vdwg.mxu0
        %432 = vmatpush.bf16.msra.mxu0 0
        %433 = vmatpush.bf16.msra.mxu0 0
        %434 = vmatpush.bf16.msra.mxu0 0
        %435 = vmatpush.bf16.msra.mxu0 0
        %436 = vmatpush.bf16.msra.mxu0 0
        %437 = vmatpush.bf16.msra.mxu0 0
        %438 = vmatpush.bf16.msra.mxu0 %v411
        %439 = vmatpush.bf16.msra.mxu0 %v409
        %440 = vmatmul.bf16.gmra.mxu0 %v417
        %v441 = vpop.f32.mrf.mxu0
        %v442 = vadd.f32 %v393, %v441
        %v443 = vpop.f32.mrf.mxu0
        %444 = vdwg.mxu0
        %445 = vst [vmem:[%s328] sm:$0xff] %v429
        %446 = vst [vmem:[%s328 + $0x8] sm:$0xff] %v442
        %s447 = sand.u32 %s172, 1
        %s448 = scalar_lea.sflag [#allocation4], %s447
        %s449 = sand.u32 %s172, 1
        %s450 = smul.addr %s449, 16
        %s451 = scalar_lea.vmem [#allocation3], %s450
        // Predicated region
        $region79: #{transformer_forward.5} parent=73 // pred_check
          %p452 = pneg %p182
        $region80: #{transformer_forward.5} parent=73 // pred_check_branch
          %454 = sbr.rel (%p452) target = $region82
        $region81: #{transformer_forward.5} parent=73 // pred_region
          %s455 = smul.u32 2, %s26
          %457 = vsyncadd %s448, 0
          %s458 = smul.addr %s25, 4
          %s459 = sadd.s32 %s455, %s458
          %s460 = smul.addr %s24, 4
          %s461 = sadd.s32 %s459, %s460
          %s462 = smul.addr %s461, 8
          %s463 = scalar_lea.hbm %s5, %s462
          %s465 = sshll.u32 %s451, 4
          %s466 = int_to_ptr.vmem [resolvable:$true] %s465
          %s467 = sshll.u32 %s463, 4
          %s468 = int_to_ptr.hbm [resolvable:$true] %s467
          %470 = dma.vmem_to_hbm [thread:$0]  %s466, 256, %s468, %s448
        $region82: #{transformer_forward.5} parent=73 // pred_fallthru
          _
      $region74: #{transformer_forward.5} parent=5 // pred_fallthru
        _
      %p471 = scmp.le.s32.totalorder 2, %s14
      // Predicated region
      $region83: #{transformer_forward.5} parent=5 // pred_check
        %p472 = pneg %p471
      $region84: #{transformer_forward.5} parent=5 // pred_check_branch
        %474 = sbr.rel (%p472) target = $region86
      $region85: #{transformer_forward.5} parent=5 // pred_region
        %s475 = ssub.s32 %s14, 2
        // Predicated region
        $region87: #{transformer_forward.5} parent=85 // pred_check
          %p476 = pneg %p188
        $region88: #{transformer_forward.5} parent=85 // pred_check_branch
          %478 = sbr.rel (%p476) target = $region90
        $region89: #{transformer_forward.5} parent=85 // pred_region
          %s479 = sand.u32 %s173, 1
          %s480 = scalar_lea.sflag [#allocation4], %s479
          %s481 = sand.u32 %s173, 1
          %s482 = smul.addr %s481, 16
          %s483 = scalar_lea.vmem [#allocation3], %s482
          %485 = dma.done %s480, 256
        $region90: #{transformer_forward.5} parent=85 // pred_fallthru
          _
      $region86: #{transformer_forward.5} parent=5 // pred_fallthru
        _
    $region6: #{transformer_forward.5} parent=1 // loop_footer
      %s18 = sadd.s32 1, %s14
    $region7: #{transformer_forward.5} parent=1 // loop_footer_branch
      %13 = sbr.rel target = $region3
    $region8: #{transformer_forward.5} parent=1 // loop_exit
      _
    %486 = vsyncpa [#allocation4], 1
    %s487 = scalar_lea.sflag [#allocation4], 1
    %488 = vsyncpa %s487, 1

// kernel: transformer_forward.3
$region0: #{transformer_forward.3}
  #allocation0 [shape = 'u32[]', space=smem, size = 0x4, offset = 0x4, fixed_abs, tag = 'smem constant byte address 0x4 - core index']
  #allocation1 [shape = 'u32[72,128]{1,0:T(1,128)}', space=vmem, size = 0x9000, scoped, tag = 'internal scratch']
  #allocation2 [shape = 'f32[8,32]{1,0:T(8,128)}', space=vmem, size = 0x1000, scoped, tag = 'scratch operand']
  %s0 = inlined_call_operand.vmem [shape: f32[2,8,32], index: 0, kind: input, shape index: {}, may-alias: {0,1}]
  %s1 = inlined_call_operand.vmem [shape: f32[2,8,32], index: 1, kind: input, shape index: {}, may-alias: {0,1}]
  %s2 = inlined_call_operand.vmem [shape: bf16[32,32], index: 2, kind: input, shape index: {}]
  %s3 = inlined_call_operand.vmem [shape: bf16[32,32], index: 3, kind: input, shape index: {}]
  %s4 = inlined_call_operand.vmem [shape: bf16[32,32], index: 4, kind: input, shape index: {}]
  %s5 = inlined_call_operand.vmem [shape: bf16[32,32], index: 5, kind: input, shape index: {}]
  %s6 = inlined_call_operand.vmem [shape: f32[1,32], index: 6, kind: input, shape index: {}]
  %s7 = inlined_call_operand.vmem [shape: f32[1,32], index: 7, kind: input, shape index: {}]
  %s8 = inlined_call_operand.vmem [shape: f32[1,32], index: 8, kind: input, shape index: {}]
  %s9 = inlined_call_operand.vmem [shape: bf16[32,128], index: 9, kind: input, shape index: {}]
  %s10 = inlined_call_operand.vmem [shape: f32[1,128], index: 10, kind: input, shape index: {}]
  %s11 = inlined_call_operand.vmem [shape: bf16[128,32], index: 11, kind: input, shape index: {}]
  %s12 = inlined_call_operand.vmem [shape: f32[1,32], index: 12, kind: input, shape index: {}]
  %s13 = inlined_call_operand.vmem [shape: f32[2,8,32], index: 13, kind: output, shape index: {}]
  %s14 = sld [smem:[#allocation0]]
  $region85: #{transformer_forward.3} parent=0
    _
  %s16 = ssub.s32 1, %s14
  %s17 = scalar_select 0, %s16, %s14
  loop: start=0, step=1, limit=4
  $region2: #{transformer_forward.3} parent=0 // loop_pre_header
    _
  $region3: #{transformer_forward.3} parent=0 // loop_header
    %s19 = sphi 0, %s23
    %p20 = scmp.ge.s32.totalorder %s19, 4
    %s26 = sphi 0, %s38
    %s27 = sphi 0, %s34
    %s28 = sphi 0, %s26
    %s29 = sphi 0, %s27
    %s30 = sphi 0, %s28
    %s31 = sphi 0, %s29
    %s43 = sphi 0, %s45
    %s46 = sphi 0, %s43
    %s47 = sphi 0, %s46
    %s63 = sphi 0, %s47
    %s69 = sphi 0, %s71
    %s72 = sphi 0, %s69
    %s73 = sphi 0, %s72
    %s89 = sphi 0, %s73
    %s93 = sphi 0, %s93
    %s95 = sphi 0, %s93
    %s96 = sphi 0, %s95
    %s110 = sphi 0, %s96
    %s114 = sphi 0, %s114
    %s116 = sphi 0, %s114
    %s117 = sphi 0, %s116
    %s131 = sphi 0, %s117
    %s135 = sphi 0, %s135
    %s137 = sphi 0, %s135
    %s138 = sphi 0, %s137
    %s152 = sphi 0, %s138
    %s156 = sphi 0, %s156
    %s158 = sphi 0, %s156
    %s159 = sphi 0, %s158
    %s173 = sphi 0, %s159
    %s177 = sphi 0, %s177
    %s179 = sphi 0, %s177
    %s180 = sphi 0, %s179
    %s194 = sphi 0, %s180
    %s198 = sphi 0, %s198
    %s200 = sphi 0, %s198
    %s201 = sphi 0, %s200
    %s215 = sphi 0, %s201
    %s219 = sphi 0, %s219
    %s221 = sphi 0, %s219
    %s222 = sphi 0, %s221
    %s236 = sphi 0, %s222
    %s240 = sphi 0, %s240
    %s242 = sphi 0, %s240
    %s243 = sphi 0, %s242
    %s257 = sphi 0, %s243
    %s261 = sphi 0, %s261
    %s263 = sphi 0, %s261
    %s264 = sphi 0, %s263
    %s278 = sphi 0, %s264
    %s282 = sphi 0, %s282
    %s284 = sphi 0, %s282
    %s285 = sphi 0, %s284
    %s299 = sphi 0, %s285
    %s303 = sphi 0, %s303
    %s305 = sphi 0, %s303
    %s306 = sphi 0, %s305
    %s320 = sphi 0, %s306
    %s328 = sphi 0, %s330
    %s331 = sphi 0, %s328
    %s332 = sphi 0, %s331
    %s348 = sphi 0, %s332
  $region4: #{transformer_forward.3} parent=0 // loop_header_branch
    %22 = sbr.rel (%p20) target = $region8
  $region5: #{transformer_forward.3} parent=0 // loop_body
    %s24 = ssub.s32 %s19, 1
    %s25 = ssub.s32 %s19, 2
    %s32 = sadd.s32 1, %s27
    %p33 = scmp.ge.s32.totalorder %s32, 1
    %s34 = scalar_select %p33, 0, %s32
    %s35 = sadd.s32 1, %s26
    %s36 = scalar_select %p33, %s35, %s26
    %p37 = scmp.ge.s32.totalorder %s36, 2
    %s38 = scalar_select %p37, 0, %s36
    %s39 = ssub.s32 %s26, %s38
    %s40 = ssub.s32 %s27, %s34
    %s41 = sor.u32 %s39, %s40
    %p42 = scmp.eq.s32.totalorder %s41, 0
    %s44 = sadd.s32 %s43, 1
    %s45 = scalar_select %p42, %s43, %s44
    %p48 = pneg %p42
    %p49 = scmp.eq.s32.totalorder %s19, 1
    %p50 = por %p48, %p49
    %p51 = scmp.ne.s32.totalorder %s43, %s46
    %p52 = scmp.eq.s32.totalorder %s19, 0
    %p53 = por %p51, %p52
    %p54 = scmp.ne.s32.totalorder %s43, %s46
    %p55 = scmp.eq.s32.totalorder %s24, 1
    %p56 = por %p54, %p55
    %p57 = scmp.ne.s32.totalorder %s46, %s47
    %p58 = scmp.eq.s32.totalorder %s24, 0
    %p59 = por %p57, %p58
    %p60 = scmp.ne.s32.totalorder %s46, %s47
    %p61 = scmp.eq.s32.totalorder %s25, 1
    %p62 = por %p60, %p61
    %p64 = scmp.ne.s32.totalorder %s47, %s63
    %p65 = scmp.eq.s32.totalorder %s25, 0
    %p66 = por %p64, %p65
    %s67 = ssub.s32 %s26, %s38
    %p68 = scmp.eq.s32.totalorder %s67, 0
    %s70 = sadd.s32 %s69, 1
    %s71 = scalar_select %p68, %s69, %s70
    %p74 = pneg %p68
    %p75 = scmp.eq.s32.totalorder %s19, 1
    %p76 = por %p74, %p75
    %p77 = scmp.ne.s32.totalorder %s69, %s72
    %p78 = scmp.eq.s32.totalorder %s19, 0
    %p79 = por %p77, %p78
    %p80 = scmp.ne.s32.totalorder %s69, %s72
    %p81 = scmp.eq.s32.totalorder %s24, 1
    %p82 = por %p80, %p81
    %p83 = scmp.ne.s32.totalorder %s72, %s73
    %p84 = scmp.eq.s32.totalorder %s24, 0
    %p85 = por %p83, %p84
    %p86 = scmp.ne.s32.totalorder %s72, %s73
    %p87 = scmp.eq.s32.totalorder %s25, 1
    %p88 = por %p86, %p87
    %p90 = scmp.ne.s32.totalorder %s73, %s89
    %p91 = scmp.eq.s32.totalorder %s25, 0
    %p92 = por %p90, %p91
    %s94 = sadd.s32 %s93, 1
    %p97 = scmp.eq.s32.totalorder %s19, 1
    %p98 = scmp.ne.s32.totalorder %s93, %s95
    %p99 = scmp.eq.s32.totalorder %s19, 0
    %p100 = por %p98, %p99
    %p101 = scmp.ne.s32.totalorder %s93, %s95
    %p102 = scmp.eq.s32.totalorder %s24, 1
    %p103 = por %p101, %p102
    %p104 = scmp.ne.s32.totalorder %s95, %s96
    %p105 = scmp.eq.s32.totalorder %s24, 0
    %p106 = por %p104, %p105
    %p107 = scmp.ne.s32.totalorder %s95, %s96
    %p108 = scmp.eq.s32.totalorder %s25, 1
    %p109 = por %p107, %p108
    %p111 = scmp.ne.s32.totalorder %s96, %s110
    %p112 = scmp.eq.s32.totalorder %s25, 0
    %p113 = por %p111, %p112
    %s115 = sadd.s32 %s114, 1
    %p118 = scmp.eq.s32.totalorder %s19, 1
    %p119 = scmp.ne.s32.totalorder %s114, %s116
    %p120 = scmp.eq.s32.totalorder %s19, 0
    %p121 = por %p119, %p120
    %p122 = scmp.ne.s32.totalorder %s114, %s116
    %p123 = scmp.eq.s32.totalorder %s24, 1
    %p124 = por %p122, %p123
    %p125 = scmp.ne.s32.totalorder %s116, %s117
    %p126 = scmp.eq.s32.totalorder %s24, 0
    %p127 = por %p125, %p126
    %p128 = scmp.ne.s32.totalorder %s116, %s117
    %p129 = scmp.eq.s32.totalorder %s25, 1
    %p130 = por %p128, %p129
    %p132 = scmp.ne.s32.totalorder %s117, %s131
    %p133 = scmp.eq.s32.totalorder %s25, 0
    %p134 = por %p132, %p133
    %s136 = sadd.s32 %s135, 1
    %p139 = scmp.eq.s32.totalorder %s19, 1
    %p140 = scmp.ne.s32.totalorder %s135, %s137
    %p141 = scmp.eq.s32.totalorder %s19, 0
    %p142 = por %p140, %p141
    %p143 = scmp.ne.s32.totalorder %s135, %s137
    %p144 = scmp.eq.s32.totalorder %s24, 1
    %p145 = por %p143, %p144
    %p146 = scmp.ne.s32.totalorder %s137, %s138
    %p147 = scmp.eq.s32.totalorder %s24, 0
    %p148 = por %p146, %p147
    %p149 = scmp.ne.s32.totalorder %s137, %s138
    %p150 = scmp.eq.s32.totalorder %s25, 1
    %p151 = por %p149, %p150
    %p153 = scmp.ne.s32.totalorder %s138, %s152
    %p154 = scmp.eq.s32.totalorder %s25, 0
    %p155 = por %p153, %p154
    %s157 = sadd.s32 %s156, 1
    %p160 = scmp.eq.s32.totalorder %s19, 1
    %p161 = scmp.ne.s32.totalorder %s156, %s158
    %p162 = scmp.eq.s32.totalorder %s19, 0
    %p163 = por %p161, %p162
    %p164 = scmp.ne.s32.totalorder %s156, %s158
    %p165 = scmp.eq.s32.totalorder %s24, 1
    %p166 = por %p164, %p165
    %p167 = scmp.ne.s32.totalorder %s158, %s159
    %p168 = scmp.eq.s32.totalorder %s24, 0
    %p169 = por %p167, %p168
    %p170 = scmp.ne.s32.totalorder %s158, %s159
    %p171 = scmp.eq.s32.totalorder %s25, 1
    %p172 = por %p170, %p171
    %p174 = scmp.ne.s32.totalorder %s159, %s173
    %p175 = scmp.eq.s32.totalorder %s25, 0
    %p176 = por %p174, %p175
    %s178 = sadd.s32 %s177, 1
    %p181 = scmp.eq.s32.totalorder %s19, 1
    %p182 = scmp.ne.s32.totalorder %s177, %s179
    %p183 = scmp.eq.s32.totalorder %s19, 0
    %p184 = por %p182, %p183
    %p185 = scmp.ne.s32.totalorder %s177, %s179
    %p186 = scmp.eq.s32.totalorder %s24, 1
    %p187 = por %p185, %p186
    %p188 = scmp.ne.s32.totalorder %s179, %s180
    %p189 = scmp.eq.s32.totalorder %s24, 0
    %p190 = por %p188, %p189
    %p191 = scmp.ne.s32.totalorder %s179, %s180
    %p192 = scmp.eq.s32.totalorder %s25, 1
    %p193 = por %p191, %p192
    %p195 = scmp.ne.s32.totalorder %s180, %s194
    %p196 = scmp.eq.s32.totalorder %s25, 0
    %p197 = por %p195, %p196
    %s199 = sadd.s32 %s198, 1
    %p202 = scmp.eq.s32.totalorder %s19, 1
    %p203 = scmp.ne.s32.totalorder %s198, %s200
    %p204 = scmp.eq.s32.totalorder %s19, 0
    %p205 = por %p203, %p204
    %p206 = scmp.ne.s32.totalorder %s198, %s200
    %p207 = scmp.eq.s32.totalorder %s24, 1
    %p208 = por %p206, %p207
    %p209 = scmp.ne.s32.totalorder %s200, %s201
    %p210 = scmp.eq.s32.totalorder %s24, 0
    %p211 = por %p209, %p210
    %p212 = scmp.ne.s32.totalorder %s200, %s201
    %p213 = scmp.eq.s32.totalorder %s25, 1
    %p214 = por %p212, %p213
    %p216 = scmp.ne.s32.totalorder %s201, %s215
    %p217 = scmp.eq.s32.totalorder %s25, 0
    %p218 = por %p216, %p217
    %s220 = sadd.s32 %s219, 1
    %p223 = scmp.eq.s32.totalorder %s19, 1
    %p224 = scmp.ne.s32.totalorder %s219, %s221
    %p225 = scmp.eq.s32.totalorder %s19, 0
    %p226 = por %p224, %p225
    %p227 = scmp.ne.s32.totalorder %s219, %s221
    %p228 = scmp.eq.s32.totalorder %s24, 1
    %p229 = por %p227, %p228
    %p230 = scmp.ne.s32.totalorder %s221, %s222
    %p231 = scmp.eq.s32.totalorder %s24, 0
    %p232 = por %p230, %p231
    %p233 = scmp.ne.s32.totalorder %s221, %s222
    %p234 = scmp.eq.s32.totalorder %s25, 1
    %p235 = por %p233, %p234
    %p237 = scmp.ne.s32.totalorder %s222, %s236
    %p238 = scmp.eq.s32.totalorder %s25, 0
    %p239 = por %p237, %p238
    %s241 = sadd.s32 %s240, 1
    %p244 = scmp.eq.s32.totalorder %s19, 1
    %p245 = scmp.ne.s32.totalorder %s240, %s242
    %p246 = scmp.eq.s32.totalorder %s19, 0
    %p247 = por %p245, %p246
    %p248 = scmp.ne.s32.totalorder %s240, %s242
    %p249 = scmp.eq.s32.totalorder %s24, 1
    %p250 = por %p248, %p249
    %p251 = scmp.ne.s32.totalorder %s242, %s243
    %p252 = scmp.eq.s32.totalorder %s24, 0
    %p253 = por %p251, %p252
    %p254 = scmp.ne.s32.totalorder %s242, %s243
    %p255 = scmp.eq.s32.totalorder %s25, 1
    %p256 = por %p254, %p255
    %p258 = scmp.ne.s32.totalorder %s243, %s257
    %p259 = scmp.eq.s32.totalorder %s25, 0
    %p260 = por %p258, %p259
    %s262 = sadd.s32 %s261, 1
    %p265 = scmp.eq.s32.totalorder %s19, 1
    %p266 = scmp.ne.s32.totalorder %s261, %s263
    %p267 = scmp.eq.s32.totalorder %s19, 0
    %p268 = por %p266, %p267
    %p269 = scmp.ne.s32.totalorder %s261, %s263
    %p270 = scmp.eq.s32.totalorder %s24, 1
    %p271 = por %p269, %p270
    %p272 = scmp.ne.s32.totalorder %s263, %s264
    %p273 = scmp.eq.s32.totalorder %s24, 0
    %p274 = por %p272, %p273
    %p275 = scmp.ne.s32.totalorder %s263, %s264
    %p276 = scmp.eq.s32.totalorder %s25, 1
    %p277 = por %p275, %p276
    %p279 = scmp.ne.s32.totalorder %s264, %s278
    %p280 = scmp.eq.s32.totalorder %s25, 0
    %p281 = por %p279, %p280
    %s283 = sadd.s32 %s282, 1
    %p286 = scmp.eq.s32.totalorder %s19, 1
    %p287 = scmp.ne.s32.totalorder %s282, %s284
    %p288 = scmp.eq.s32.totalorder %s19, 0
    %p289 = por %p287, %p288
    %p290 = scmp.ne.s32.totalorder %s282, %s284
    %p291 = scmp.eq.s32.totalorder %s24, 1
    %p292 = por %p290, %p291
    %p293 = scmp.ne.s32.totalorder %s284, %s285
    %p294 = scmp.eq.s32.totalorder %s24, 0
    %p295 = por %p293, %p294
    %p296 = scmp.ne.s32.totalorder %s284, %s285
    %p297 = scmp.eq.s32.totalorder %s25, 1
    %p298 = por %p296, %p297
    %p300 = scmp.ne.s32.totalorder %s285, %s299
    %p301 = scmp.eq.s32.totalorder %s25, 0
    %p302 = por %p300, %p301
    %s304 = sadd.s32 %s303, 1
    %p307 = scmp.eq.s32.totalorder %s19, 1
    %p308 = scmp.ne.s32.totalorder %s303, %s305
    %p309 = scmp.eq.s32.totalorder %s19, 0
    %p310 = por %p308, %p309
    %p311 = scmp.ne.s32.totalorder %s303, %s305
    %p312 = scmp.eq.s32.totalorder %s24, 1
    %p313 = por %p311, %p312
    %p314 = scmp.ne.s32.totalorder %s305, %s306
    %p315 = scmp.eq.s32.totalorder %s24, 0
    %p316 = por %p314, %p315
    %p317 = scmp.ne.s32.totalorder %s305, %s306
    %p318 = scmp.eq.s32.totalorder %s25, 1
    %p319 = por %p317, %p318
    %p321 = scmp.ne.s32.totalorder %s306, %s320
    %p322 = scmp.eq.s32.totalorder %s25, 0
    %p323 = por %p321, %p322
    %s324 = ssub.s32 %s26, %s38
    %s325 = ssub.s32 %s27, %s34
    %s326 = sor.u32 %s324, %s325
    %p327 = scmp.eq.s32.totalorder %s326, 0
    %s329 = sadd.s32 %s328, 1
    %s330 = scalar_select %p327, %s328, %s329
    %p333 = pneg %p327
    %p334 = scmp.eq.s32.totalorder %s19, 1
    %p335 = por %p333, %p334
    %p336 = scmp.ne.s32.totalorder %s328, %s331
    %p337 = scmp.eq.s32.totalorder %s19, 0
    %p338 = por %p336, %p337
    %p339 = scmp.ne.s32.totalorder %s328, %s331
    %p340 = scmp.eq.s32.totalorder %s24, 1
    %p341 = por %p339, %p340
    %p342 = scmp.ne.s32.totalorder %s331, %s332
    %p343 = scmp.eq.s32.totalorder %s24, 0
    %p344 = por %p342, %p343
    %p345 = scmp.ne.s32.totalorder %s331, %s332
    %p346 = scmp.eq.s32.totalorder %s25, 1
    %p347 = por %p345, %p346
    %p349 = scmp.ne.s32.totalorder %s332, %s348
    %p350 = scmp.eq.s32.totalorder %s25, 0
    %p351 = por %p349, %p350
    %p352 = scmp.le.s32.totalorder 1, %s19
    %p353 = scmp.lt.s32.totalorder %s19, 3
    %p354 = pnand %p352, %p353
    %p355 = pneg %p354
    // Predicated region
    $region9: #{transformer_forward.3} parent=5 // pred_check
      _
    $region10: #{transformer_forward.3} parent=5 // pred_check_branch
      %357 = sbr.rel (%p354) target = $region12
    $region11: #{transformer_forward.3} parent=5 // pred_region
      %s358 = ssub.s32 %s19, 1
      // Predicated region
      $region13: #{transformer_forward.3} parent=11 // pred_check
        %p359 = pneg %p106
      $region14: #{transformer_forward.3} parent=11 // pred_check_branch
        %361 = sbr.rel (%p359) target = $region16
      $region15: #{transformer_forward.3} parent=11 // pred_region
        _
      $region16: #{transformer_forward.3} parent=11 // pred_fallthru
        _
      // Predicated region
      $region17: #{transformer_forward.3} parent=11 // pred_check
        %p362 = pneg %p127
      $region18: #{transformer_forward.3} parent=11 // pred_check_branch
        %364 = sbr.rel (%p362) target = $region20
      $region19: #{transformer_forward.3} parent=11 // pred_region
        _
      $region20: #{transformer_forward.3} parent=11 // pred_fallthru
        _
      // Predicated region
      $region21: #{transformer_forward.3} parent=11 // pred_check
        %p365 = pneg %p148
      $region22: #{transformer_forward.3} parent=11 // pred_check_branch
        %367 = sbr.rel (%p365) target = $region24
      $region23: #{transformer_forward.3} parent=11 // pred_region
        _
      $region24: #{transformer_forward.3} parent=11 // pred_fallthru
        _
      // Predicated region
      $region25: #{transformer_forward.3} parent=11 // pred_check
        %p368 = pneg %p169
      $region26: #{transformer_forward.3} parent=11 // pred_check_branch
        %370 = sbr.rel (%p368) target = $region28
      $region27: #{transformer_forward.3} parent=11 // pred_region
        _
      $region28: #{transformer_forward.3} parent=11 // pred_fallthru
        _
      // Predicated region
      $region29: #{transformer_forward.3} parent=11 // pred_check
        %p371 = pneg %p190
      $region30: #{transformer_forward.3} parent=11 // pred_check_branch
        %373 = sbr.rel (%p371) target = $region32
      $region31: #{transformer_forward.3} parent=11 // pred_region
        _
      $region32: #{transformer_forward.3} parent=11 // pred_fallthru
        _
      // Predicated region
      $region33: #{transformer_forward.3} parent=11 // pred_check
        %p374 = pneg %p211
      $region34: #{transformer_forward.3} parent=11 // pred_check_branch
        %376 = sbr.rel (%p374) target = $region36
      $region35: #{transformer_forward.3} parent=11 // pred_region
        _
      $region36: #{transformer_forward.3} parent=11 // pred_fallthru
        _
      // Predicated region
      $region37: #{transformer_forward.3} parent=11 // pred_check
        %p377 = pneg %p232
      $region38: #{transformer_forward.3} parent=11 // pred_check_branch
        %379 = sbr.rel (%p377) target = $region40
      $region39: #{transformer_forward.3} parent=11 // pred_region
        _
      $region40: #{transformer_forward.3} parent=11 // pred_fallthru
        _
      // Predicated region
      $region41: #{transformer_forward.3} parent=11 // pred_check
        %p380 = pneg %p253
      $region42: #{transformer_forward.3} parent=11 // pred_check_branch
        %382 = sbr.rel (%p380) target = $region44
      $region43: #{transformer_forward.3} parent=11 // pred_region
        _
      $region44: #{transformer_forward.3} parent=11 // pred_fallthru
        _
      // Predicated region
      $region45: #{transformer_forward.3} parent=11 // pred_check
        %p383 = pneg %p274
      $region46: #{transformer_forward.3} parent=11 // pred_check_branch
        %385 = sbr.rel (%p383) target = $region48
      $region47: #{transformer_forward.3} parent=11 // pred_region
        _
      $region48: #{transformer_forward.3} parent=11 // pred_fallthru
        _
      // Predicated region
      $region49: #{transformer_forward.3} parent=11 // pred_check
        %p386 = pneg %p295
      $region50: #{transformer_forward.3} parent=11 // pred_check_branch
        %388 = sbr.rel (%p386) target = $region52
      $region51: #{transformer_forward.3} parent=11 // pred_region
        _
      $region52: #{transformer_forward.3} parent=11 // pred_fallthru
        _
      // Predicated region
      $region53: #{transformer_forward.3} parent=11 // pred_check
        %p389 = pneg %p316
      $region54: #{transformer_forward.3} parent=11 // pred_check_branch
        %391 = sbr.rel (%p389) target = $region56
      $region55: #{transformer_forward.3} parent=11 // pred_region
        _
      $region56: #{transformer_forward.3} parent=11 // pred_fallthru
        _
    $region12: #{transformer_forward.3} parent=5 // pred_fallthru
      _
    %p392 = scmp.lt.s32.totalorder %s19, 2
    // Predicated region
    $region57: #{transformer_forward.3} parent=5 // pred_check
      %p393 = pneg %p392
    $region58: #{transformer_forward.3} parent=5 // pred_check_branch
      %395 = sbr.rel (%p393) target = $region60
    $region59: #{transformer_forward.3} parent=5 // pred_region
      // Predicated region
      $region61: #{transformer_forward.3} parent=59 // pred_check
        %p396 = pneg %p53
      $region62: #{transformer_forward.3} parent=59 // pred_check_branch
        %398 = sbr.rel (%p396) target = $region64
      $region63: #{transformer_forward.3} parent=59 // pred_region
        %p399 = scmp.lt.s32.totalorder %s26, 1
        %s400 = scalar_select %p399, %s26, 1
        %p401 = scmp.lt.s32.totalorder %s27, 0
        %s402 = scalar_select %p401, %s27, 0
        %s403 = sadd.s32 %s402, %s400
        %s404 = smul.addr %s403, 8
        %s405 = scalar_lea.vmem %s0, %s404
      $region64: #{transformer_forward.3} parent=59 // pred_fallthru
        _
      // Predicated region
      $region65: #{transformer_forward.3} parent=59 // pred_check
        %p406 = pneg %p79
      $region66: #{transformer_forward.3} parent=59 // pred_check_branch
        %408 = sbr.rel (%p406) target = $region68
      $region67: #{transformer_forward.3} parent=59 // pred_region
        %p409 = scmp.lt.s32.totalorder %s26, 1
        %s410 = scalar_select %p409, %s26, 1
        %s411 = smul.addr %s410, 8
        %s412 = scalar_lea.vmem %s1, %s411
      $region68: #{transformer_forward.3} parent=59 // pred_fallthru
        _
    $region60: #{transformer_forward.3} parent=5 // pred_fallthru
      _
    %p413 = scmp.le.s32.totalorder 1, %s19
    %p414 = scmp.lt.s32.totalorder %s19, 3
    %p415 = pnand %p413, %p414
    %p416 = pneg %p415
    // Predicated region
    $region69: #{transformer_forward.3} parent=5 // pred_check
      _
    $region70: #{transformer_forward.3} parent=5 // pred_check_branch
      %418 = sbr.rel (%p415) target = $region72
    $region71: #{transformer_forward.3} parent=5 // pred_region
      %s419 = ssub.s32 %s19, 1
      %p420 = scmp.lt.s32.totalorder %s28, 1
      %s421 = scalar_select %p420, %s28, 1
      %p422 = scmp.lt.s32.totalorder %s29, 0
      %s423 = scalar_select %p422, %s29, 0
      %s424 = sadd.s32 %s423, %s421
      %s425 = smul.addr %s424, 8
      %s426 = scalar_lea.vmem %s0, %s425
      %p427 = pneg %p59
      %p428 = pneg %p56
      %p429 = scmp.lt.s32.totalorder %s28, 1
      %s430 = scalar_select %p429, %s28, 1
      %s431 = smul.addr %s430, 8
      %s432 = scalar_lea.vmem %s1, %s431
      %p433 = pneg %p85
      %p434 = pneg %p82
      %p435 = pneg %p106
      %p436 = pneg %p103
      %p437 = pneg %p127
      %p438 = pneg %p124
      %p439 = pneg %p148
      %p440 = pneg %p145
      %p441 = pneg %p169
      %p442 = pneg %p166
      %p443 = pneg %p190
      %p444 = pneg %p187
      %p445 = pneg %p211
      %p446 = pneg %p208
      %p447 = pneg %p232
      %p448 = pneg %p229
      %p449 = pneg %p253
      %p450 = pneg %p250
      %p451 = pneg %p274
      %p452 = pneg %p271
      %p453 = pneg %p295
      %p454 = pneg %p292
      %p455 = pneg %p316
      %p456 = pneg %p313
      %p457 = pneg %p344
      %p458 = pneg %p341
      %p459 = scmp.lt.s32.totalorder %s28, 1
      %s460 = scalar_select %p459, %s28, 1
      %p461 = scmp.lt.s32.totalorder %s29, 0
      %s462 = scalar_select %p461, %s29, 0
      %s463 = sadd.s32 %s462, %s460
      %s464 = smul.addr %s463, 8
      %s465 = scalar_lea.vmem %s13, %s464
      %p466 = scmp.lt.s32.totalorder %s28, 1
      %s467 = scalar_select %p466, %s28, 1
      %p468 = scmp.lt.s32.totalorder %s29, 0
      %s469 = scalar_select %p468, %s29, 0
      %s470 = sadd.s32 %s469, %s467
      %s471 = smul.addr %s470, 8
      %s472 = scalar_lea.vmem %s0, %s471
      %p473 = scmp.lt.s32.totalorder %s28, 1
      %s474 = scalar_select %p473, %s28, 1
      %s475 = smul.addr %s474, 8
      %s476 = scalar_lea.vmem %s1, %s475
      %p477 = scmp.lt.s32.totalorder %s28, 1
      %s478 = scalar_select %p477, %s28, 1
      %p479 = scmp.lt.s32.totalorder %s29, 0
      %s480 = scalar_select %p479, %s29, 0
      %s481 = sadd.s32 %s480, %s478
      %s482 = smul.addr %s481, 8
      %s483 = scalar_lea.vmem %s13, %s482
      %v485 = vld [vmem:[%s472] sm:$0xff]
      %v486 = vld [vmem:[%s476] sm:$0xff]
      %v487 = vpack.c.bf16 %v485, %v485
      %v488 = vpack.c.bf16 %v486, %v486
      %v489 = vld [vmem:[%s2] sm:$0xf]
      %v490 = vld [vmem:[%s2 + $0x4] sm:$0xf]
      %v491 = vld [vmem:[%s2 + $0x8] sm:$0xf]
      %v492 = vld [vmem:[%s2 + $0xc] sm:$0xf]
      %v497 = vunpack.c.l.b16 %v489
      %v498 = vunpack.c.l.b16 %v490
      %v499 = vunpack.c.l.b16 %v491
      %v500 = vunpack.c.l.b16 %v492
      %v501 = vpack.c.b16 %v498, %v497
      %v502 = vpack.c.b16 %v500, %v499
      %vm505 = vcmask 261120
      %v507 = vsel %vm505, %v487, 0
      %509 = vmatpush.bf16.msra.mxu0 0
      %510 = vmatpush.bf16.msra.mxu0 0
      %511 = vmatpush.bf16.msra.mxu0 0
      %512 = vmatpush.bf16.msra.mxu0 0
      %513 = vmatpush.bf16.msra.mxu0 0
      %514 = vmatpush.bf16.msra.mxu0 0
      %515 = vmatpush.bf16.msra.mxu0 %v502
      %516 = vmatpush.bf16.msra.mxu0 %v501
      %517 = vmatmul.bf16.gmra.mxu0 %v507
      %v518 = vpop.f32.mrf.mxu0
      %v519 = vadd.f32 0.0, %v518
      %v520 = vpop.f32.mrf.mxu0
      %521 = vdwg.mxu0
      %v522 = vld [vmem:[%s3] sm:$0xf]
      %v523 = vld [vmem:[%s3 + $0x4] sm:$0xf]
      %v524 = vld [vmem:[%s3 + $0x8] sm:$0xf]
      %v525 = vld [vmem:[%s3 + $0xc] sm:$0xf]
      %v530 = vunpack.c.l.b16 %v522
      %v531 = vunpack.c.l.b16 %v523
      %v532 = vunpack.c.l.b16 %v524
      %v533 = vunpack.c.l.b16 %v525
      %v534 = vpack.c.b16 %v531, %v530
      %v535 = vpack.c.b16 %v533, %v532
      %v539 = vsel %vm505, %v488, 0
      %541 = vmatpush.bf16.msra.mxu0 0
      %542 = vmatpush.bf16.msra.mxu0 0
      %543 = vmatpush.bf16.msra.mxu0 0
      %544 = vmatpush.bf16.msra.mxu0 0
      %545 = vmatpush.bf16.msra.mxu0 0
      %546 = vmatpush.bf16.msra.mxu0 0
      %547 = vmatpush.bf16.msra.mxu0 %v535
      %548 = vmatpush.bf16.msra.mxu0 %v534
      %549 = vmatmul.bf16.gmra.mxu0 %v539
      %v550 = vpop.f32.mrf.mxu0
      %v551 = vadd.f32 0.0, %v550
      %v552 = vpop.f32.mrf.mxu0
      %553 = vdwg.mxu0
      %v554 = vld [vmem:[%s4] sm:$0xf]
      %v555 = vld [vmem:[%s4 + $0x4] sm:$0xf]
      %v556 = vld [vmem:[%s4 + $0x8] sm:$0xf]
      %v557 = vld [vmem:[%s4 + $0xc] sm:$0xf]
      %v562 = vunpack.c.l.b16 %v554
      %v563 = vunpack.c.l.b16 %v555
      %v564 = vunpack.c.l.b16 %v556
      %v565 = vunpack.c.l.b16 %v557
      %v566 = vpack.c.b16 %v563, %v562
      %v567 = vpack.c.b16 %v565, %v564
      %570 = vmatpush.bf16.msra.mxu0 0
      %571 = vmatpush.bf16.msra.mxu0 0
      %572 = vmatpush.bf16.msra.mxu0 0
      %573 = vmatpush.bf16.msra.mxu0 0
      %574 = vmatpush.bf16.msra.mxu0 0
      %575 = vmatpush.bf16.msra.mxu0 0
      %576 = vmatpush.bf16.msra.mxu0 %v567
      %577 = vmatpush.bf16.msra.mxu0 %v566
      %578 = vmatmul.bf16.gmra.mxu0 %v539
      %v579 = vpop.f32.mrf.mxu0
      %v580 = vadd.f32 0.0, %v579
      %v581 = vpop.f32.mrf.mxu0
      %582 = vdwg.mxu0
      %s583 = smul.u32 %s29, 8
      %v584 = vlaneseq
      %v585 = vshrl.u32 %v584, 7
      %v586 = vstv %s583
      %v587 = vadd.s32 %v586, %v585
      %v588 = vlaneseq
      %v589 = vand.u32 %v588, 127
      %vm590 = vcmp.ge.s32.totalorder %v587, %v589
      %v591 = vpack.c.bf16 %v519, %v519
      %v592 = vpack.c.bf16 %v580, %v580
      %v593 = vpack.c.bf16 %v551, %v551
      %vm594 = vcmask 64512
      %v596 = vsel %vm594, %v591, 0
      %vm598 = vcmask 1043456
      %v600 = vsel %vm598, %v593, 0
      %602 = vmatpush.bf16.msra.mxu0 0
      %603 = vmatpush.bf16.msra.mxu0 0
      %604 = vmatpush.bf16.msra.mxu0 0
      %605 = vmatpush.bf16.msra.mxu0 0
      %606 = vmatpush.bf16.msra.mxu0 0
      %607 = vmatpush.bf16.msra.mxu0 0
      %608 = vmatpush.bf16.msra.mxu0 0
      %609 = vmatpush.bf16.msra.mxu0 %v600
      %610 = vmatmul.bf16.gmra.mxu0 %v596
      %v611 = vpop.f32.mrf.mxu0
      %v612 = vadd.f32 0.0, %v611
      %v613 = vpop.f32.mrf.mxu0
      %614 = vdwg.mxu0
      %v615 = vmul.f32 %v612, 0.35355338
      %v616 = vsub.f32 %v615, 1e+09
      %v617 = vsel %vm590, %v615, %v616
      %v618 = vsel %vm594, %v617, -inf
      %619 = vmax.xlane.f32.xlu0 %v618
      %v620 = vpop.xlane.xlu0 %619
      %v621 = vsub.f32 %v617, %v620
      %v622 = vmul.f32 %v621, 1.442695
      %v623 = vpow.pop %v622
      %v624 = vsel %vm594, %v623, 0.0
      %625 = vadd.xlane.f32.xlu0 %v624
      %v626 = vpop.xlane.xlu0 %625
      %v627 = vrcp.pop %v626
      %v628 = vmul.f32 %v623, %v627
      %v629 = vpack.c.bf16 %v628, %v628
      %v631 = vsel %vm594, %v629, 0
      %v634 = vsel %vm598, %v592, 0
      %636 = vmatpush.bf16.msra.mxu0 0
      %637 = vmatpush.bf16.msra.mxu0 0
      %638 = vmatpush.bf16.msra.mxu0 0
      %639 = vmatpush.bf16.msra.mxu0 0
      %640 = vmatpush.bf16.msra.mxu0 0
      %641 = vmatpush.bf16.msra.mxu0 0
      %642 = vmatpush.bf16.msra.mxu0 0
      %643 = vmatpush.bf16.msra.mxu0 %v634
      %644 = vmatmul.bf16.gmra.mxu0 %v631
      %v645 = vpop.f32.mrf.mxu0
      %v646 = vadd.f32 0.0, %v645
      %v647 = vpop.f32.mrf.mxu0
      %648 = vdwg.mxu0
      %649 = vst.msk [vmem:[#allocation2] sm:$0xff] %vm594, %v646
      %651 = vrot.lane.b32.xlu0 %v591, 120
      %v652 = vpop.permute.xlu0 %651
      %654 = vrot.lane.b32.xlu0 %v593, 120
      %v655 = vpop.permute.xlu0 %654
      %v657 = vsel %vm594, %v652, 0
      %v660 = vsel %vm598, %v655, 0
      %662 = vmatpush.bf16.msra.mxu0 0
      %663 = vmatpush.bf16.msra.mxu0 0
      %664 = vmatpush.bf16.msra.mxu0 0
      %665 = vmatpush.bf16.msra.mxu0 0
      %666 = vmatpush.bf16.msra.mxu0 0
      %667 = vmatpush.bf16.msra.mxu0 0
      %668 = vmatpush.bf16.msra.mxu0 0
      %669 = vmatpush.bf16.msra.mxu0 %v660
      %670 = vmatmul.bf16.gmra.mxu0 %v657
      %v671 = vpop.f32.mrf.mxu0
      %v672 = vadd.f32 0.0, %v671
      %v673 = vpop.f32.mrf.mxu0
      %674 = vdwg.mxu0
      %v675 = vmul.f32 %v672, 0.35355338
      %v676 = vsub.f32 %v675, 1e+09
      %v677 = vsel %vm590, %v675, %v676
      %v678 = vsel %vm594, %v677, -inf
      %679 = vmax.xlane.f32.xlu0 %v678
      %v680 = vpop.xlane.xlu0 %679
      %v681 = vsub.f32 %v677, %v680
      %v682 = vmul.f32 %v681, 1.442695
      %v683 = vpow.pop %v682
      %v684 = vsel %vm594, %v683, 0.0
      %685 = vadd.xlane.f32.xlu0 %v684
      %v686 = vpop.xlane.xlu0 %685
      %v687 = vrcp.pop %v686
      %v688 = vmul.f32 %v683, %v687
      %v689 = vpack.c.bf16 %v688, %v688
      %691 = vrot.lane.b32.xlu0 %v592, 120
      %v692 = vpop.permute.xlu0 %691
      %v694 = vsel %vm594, %v689, 0
      %v697 = vsel %vm598, %v692, 0
      %699 = vmatpush.bf16.msra.mxu0 0
      %700 = vmatpush.bf16.msra.mxu0 0
      %701 = vmatpush.bf16.msra.mxu0 0
      %702 = vmatpush.bf16.msra.mxu0 0
      %703 = vmatpush.bf16.msra.mxu0 0
      %704 = vmatpush.bf16.msra.mxu0 0
      %705 = vmatpush.bf16.msra.mxu0 0
      %706 = vmatpush.bf16.msra.mxu0 %v697
      %707 = vmatmul.bf16.gmra.mxu0 %v694
      %v708 = vpop.f32.mrf.mxu0
      %v709 = vadd.f32 0.0, %v708
      %v710 = vpop.f32.mrf.mxu0
      %711 = vdwg.mxu0
      %713 = vrot.lane.b32.xlu0 %v709, 8
      %v714 = vpop.permute.xlu0 %713
      %vm716 = vcmask 130112
      %717 = vst.msk [vmem:[#allocation2] sm:$0xff] %vm716, %v714
      %718 = vrot.lane.b32.xlu0 %v591, 112
      %v719 = vpop.permute.xlu0 %718
      %720 = vrot.lane.b32.xlu0 %v593, 112
      %v721 = vpop.permute.xlu0 %720
      %v723 = vsel %vm594, %v719, 0
      %v726 = vsel %vm598, %v721, 0
      %728 = vmatpush.bf16.msra.mxu0 0
      %729 = vmatpush.bf16.msra.mxu0 0
      %730 = vmatpush.bf16.msra.mxu0 0
      %731 = vmatpush.bf16.msra.mxu0 0
      %732 = vmatpush.bf16.msra.mxu0 0
      %733 = vmatpush.bf16.msra.mxu0 0
      %734 = vmatpush.bf16.msra.mxu0 0
      %735 = vmatpush.bf16.msra.mxu0 %v726
      %736 = vmatmul.bf16.gmra.mxu0 %v723
      %v737 = vpop.f32.mrf.mxu0
      %v738 = vadd.f32 0.0, %v737
      %v739 = vpop.f32.mrf.mxu0
      %740 = vdwg.mxu0
      %v741 = vmul.f32 %v738, 0.35355338
      %v742 = vsub.f32 %v741, 1e+09
      %v743 = vsel %vm590, %v741, %v742
      %v744 = vsel %vm594, %v743, -inf
      %745 = vmax.xlane.f32.xlu0 %v744
      %v746 = vpop.xlane.xlu0 %745
      %v747 = vsub.f32 %v743, %v746
      %v748 = vmul.f32 %v747, 1.442695
      %v749 = vpow.pop %v748
      %v750 = vsel %vm594, %v749, 0.0
      %751 = vadd.xlane.f32.xlu0 %v750
      %v752 = vpop.xlane.xlu0 %751
      %v753 = vrcp.pop %v752
      %v754 = vmul.f32 %v749, %v753
      %v755 = vpack.c.bf16 %v754, %v754
      %756 = vrot.lane.b32.xlu0 %v592, 112
      %v757 = vpop.permute.xlu0 %756
      %v759 = vsel %vm594, %v755, 0
      %v762 = vsel %vm598, %v757, 0
      %764 = vmatpush.bf16.msra.mxu0 0
      %765 = vmatpush.bf16.msra.mxu0 0
      %766 = vmatpush.bf16.msra.mxu0 0
      %767 = vmatpush.bf16.msra.mxu0 0
      %768 = vmatpush.bf16.msra.mxu0 0
      %769 = vmatpush.bf16.msra.mxu0 0
      %770 = vmatpush.bf16.msra.mxu0 0
      %771 = vmatpush.bf16.msra.mxu0 %v762
      %772 = vmatmul.bf16.gmra.mxu0 %v759
      %v773 = vpop.f32.mrf.mxu0
      %v774 = vadd.f32 0.0, %v773
      %v775 = vpop.f32.mrf.mxu0
      %776 = vdwg.mxu0
      %778 = vrot.lane.b32.xlu0 %v774, 16
      %v779 = vpop.permute.xlu0 %778
      %vm781 = vcmask 195712
      %782 = vst.msk [vmem:[#allocation2] sm:$0xff] %vm781, %v779
      %783 = vrot.lane.b32.xlu0 %v591, 104
      %v784 = vpop.permute.xlu0 %783
      %785 = vrot.lane.b32.xlu0 %v593, 104
      %v786 = vpop.permute.xlu0 %785
      %v788 = vsel %vm594, %v784, 0
      %v791 = vsel %vm598, %v786, 0
      %793 = vmatpush.bf16.msra.mxu0 0
      %794 = vmatpush.bf16.msra.mxu0 0
      %795 = vmatpush.bf16.msra.mxu0 0
      %796 = vmatpush.bf16.msra.mxu0 0
      %797 = vmatpush.bf16.msra.mxu0 0
      %798 = vmatpush.bf16.msra.mxu0 0
      %799 = vmatpush.bf16.msra.mxu0 0
      %800 = vmatpush.bf16.msra.mxu0 %v791
      %801 = vmatmul.bf16.gmra.mxu0 %v788
      %v802 = vpop.f32.mrf.mxu0
      %v803 = vadd.f32 0.0, %v802
      %v804 = vpop.f32.mrf.mxu0
      %805 = vdwg.mxu0
      %v806 = vmul.f32 %v803, 0.35355338
      %v807 = vsub.f32 %v806, 1e+09
      %v808 = vsel %vm590, %v806, %v807
      %v809 = vsel %vm594, %v808, -inf
      %810 = vmax.xlane.f32.xlu0 %v809
      %v811 = vpop.xlane.xlu0 %810
      %v812 = vsub.f32 %v808, %v811
      %v813 = vmul.f32 %v812, 1.442695
      %v814 = vpow.pop %v813
      %v815 = vsel %vm594, %v814, 0.0
      %816 = vadd.xlane.f32.xlu0 %v815
      %v817 = vpop.xlane.xlu0 %816
      %v818 = vrcp.pop %v817
      %v819 = vmul.f32 %v814, %v818
      %v820 = vpack.c.bf16 %v819, %v819
      %821 = vrot.lane.b32.xlu0 %v592, 104
      %v822 = vpop.permute.xlu0 %821
      %v824 = vsel %vm594, %v820, 0
      %v827 = vsel %vm598, %v822, 0
      %829 = vmatpush.bf16.msra.mxu0 0
      %830 = vmatpush.bf16.msra.mxu0 0
      %831 = vmatpush.bf16.msra.mxu0 0
      %832 = vmatpush.bf16.msra.mxu0 0
      %833 = vmatpush.bf16.msra.mxu0 0
      %834 = vmatpush.bf16.msra.mxu0 0
      %835 = vmatpush.bf16.msra.mxu0 0
      %836 = vmatpush.bf16.msra.mxu0 %v827
      %837 = vmatmul.bf16.gmra.mxu0 %v824
      %v838 = vpop.f32.mrf.mxu0
      %v839 = vadd.f32 0.0, %v838
      %v840 = vpop.f32.mrf.mxu0
      %841 = vdwg.mxu0
      %843 = vrot.lane.b32.xlu0 %v839, 24
      %v844 = vpop.permute.xlu0 %843
      %vm846 = vcmask 261312
      %847 = vst.msk [vmem:[#allocation2] sm:$0xff] %vm846, %v844
      %v848 = vld [vmem:[#allocation2] sm:$0xff]
      %v849 = vpack.c.bf16 %v848, %v848
      %v850 = vld [vmem:[%s5] sm:$0xf]
      %v851 = vld [vmem:[%s5 + $0x4] sm:$0xf]
      %v852 = vld [vmem:[%s5 + $0x8] sm:$0xf]
      %v853 = vld [vmem:[%s5 + $0xc] sm:$0xf]
      %v854 = vld [vmem:[%s6] sm:$0x1]
      %v856 = vperm.slane %v854, 0
      %v862 = vunpack.c.l.b16 %v850
      %v863 = vunpack.c.l.b16 %v851
      %v864 = vunpack.c.l.b16 %v852
      %v865 = vunpack.c.l.b16 %v853
      %v866 = vpack.c.b16 %v863, %v862
      %v867 = vpack.c.b16 %v865, %v864
      %v871 = vsel %vm505, %v849, 0
      %873 = vmatpush.bf16.msra.mxu0 0
      %874 = vmatpush.bf16.msra.mxu0 0
      %875 = vmatpush.bf16.msra.mxu0 0
      %876 = vmatpush.bf16.msra.mxu0 0
      %877 = vmatpush.bf16.msra.mxu0 0
      %878 = vmatpush.bf16.msra.mxu0 0
      %879 = vmatpush.bf16.msra.mxu0 %v867
      %880 = vmatpush.bf16.msra.mxu0 %v866
      %881 = vmatmul.bf16.gmra.mxu0 %v871
      %v882 = vpop.f32.mrf.mxu0
      %v883 = vadd.f32 %v856, %v882
      %v884 = vpop.f32.mrf.mxu0
      %885 = vdwg.mxu0
      %v886 = vld [vmem:[%s7] sm:$0x1]
      %v887 = vld [vmem:[%s8] sm:$0x1]
      %v888 = vsel %vm505, %v883, 0.0
      %889 = vadd.xlane.f32.xlu0 %v888
      %v890 = vpop.xlane.xlu0 %889
      %v891 = vrcp.pop 32.0
      %v892 = vmul.f32 32.0, %v891
      %v893 = vsub.f32 1.0, %v892
      %v894 = vmul.f32 %v891, %v893
      %v895 = vadd.f32 %v891, %v894
      %vm896 = vweird.f32 %v891
      %v897 = vsel %vm896, %v891, %v895
      %v898 = vmul.f32 %v890, %v897
      %v899 = vsub.f32 %v883, %v898
      %v900 = vmul.f32 %v899, %v899
      %v901 = vsel %vm505, %v900, 0.0
      %902 = vadd.xlane.f32.xlu0 %v901
      %v903 = vpop.xlane.xlu0 %902
      %v904 = vmul.f32 %v903, %v897
      %v905 = vadd.f32 %v904, 1e-05
      %v906 = vrsqrt.pop %v905
      %v907 = vmul.f32 %v906, %v905
      %v908 = vmul.f32 %v907, %v906
      %v909 = vmul.f32 0.5, %v908
      %v910 = vsub.f32 1.5, %v909
      %v911 = vmul.f32 %v906, %v910
      %vm912 = vweird.f32 %v905
      %vm913 = vweird.f32 %v906
      %vm914 = vmor %vm912, %vm913
      %v915 = vsel %vm914, %v906, %v911
      %v916 = vmul.f32 %v899, %v915
      %v918 = vperm.slane %v886, 0
      %v920 = vmul.f32 %v916, %v918
      %v922 = vperm.slane %v887, 0
      %v924 = vadd.f32 %v920, %v922
      %v925 = vadd.f32 %v485, %v924
      %v926 = vpack.c.bf16 %v925, %v925
      %v927 = vld [vmem:[%s9] sm:$0xf]
      %v928 = vld [vmem:[%s9 + $0x4] sm:$0xf]
      %v929 = vld [vmem:[%s9 + $0x8] sm:$0xf]
      %v930 = vld [vmem:[%s9 + $0xc] sm:$0xf]
      %v931 = vld [vmem:[%s10] sm:$0x1]
      %v933 = vperm.slane %v931, 0
      %v939 = vunpack.c.l.b16 %v927
      %v940 = vunpack.c.l.b16 %v928
      %v941 = vunpack.c.l.b16 %v929
      %v942 = vunpack.c.l.b16 %v930
      %v943 = vpack.c.b16 %v940, %v939
      %v944 = vpack.c.b16 %v942, %v941
      %v948 = vsel %vm505, %v926, 0
      %950 = vmatpush.bf16.msra.mxu0 0
      %951 = vmatpush.bf16.msra.mxu0 0
      %952 = vmatpush.bf16.msra.mxu0 0
      %953 = vmatpush.bf16.msra.mxu0 0
      %954 = vmatpush.bf16.msra.mxu0 0
      %955 = vmatpush.bf16.msra.mxu0 0
      %956 = vmatpush.bf16.msra.mxu0 %v944
      %957 = vmatpush.bf16.msra.mxu0 %v943
      %958 = vmatmul.bf16.gmra.mxu0 %v948
      %v959 = vpop.f32.mrf.mxu0
      %v960 = vadd.f32 %v933, %v959
      %v961 = vpop.f32.mrf.mxu0
      %962 = vdwg.mxu0
      %v963 = vmul.f32 %v960, 0.5
      %v964 = vmul.f32 %v960, 0.70710677
      %vm965 = vcmp.ge.f32.partialorder %v964, 0.0
      %v966 = vsel %vm965, 1.0, -1.0
      %v967 = vand.u32 2147483647, %v964
      %v968 = vmul.f32 %v967, 0.3275911
      %v969 = vadd.f32 %v968, 1.0
      %v970 = vrcp.pop %v969
      %v971 = vmul.f32 %v969, %v970
      %v972 = vsub.f32 1.0, %v971
      %v973 = vmul.f32 %v970, %v972
      %v974 = vadd.f32 %v970, %v973
      %vm975 = vweird.f32 %v969
      %vm976 = vweird.f32 %v970
      %vm977 = vmor %vm975, %vm976
      %v978 = vsel %vm977, %v970, %v974
      %v979 = vand.u32 2147483647, %v969
      %vm980 = vcmp.eq.f32.partialorder %v979, 8.507059e+37
      %v981 = vand.u32 %v969, 2147483648
      %v982 = vor.u32 1.1754944e-38, %v981
      %v983 = vsel %vm980, %v982, %v978
      %v984 = vmul.f32 1.0, %v983
      %v985 = vmul.f32 %v984, 1.0614054
      %v986 = vadd.f32 %v985, -1.4531521
      %v987 = vmul.f32 %v986, %v984
      %v988 = vadd.f32 %v987, 1.4214138
      %v989 = vmul.f32 %v988, %v984
      %v990 = vadd.f32 %v989, -0.28449672
      %v991 = vmul.f32 %v990, %v984
      %v992 = vadd.f32 %v991, 0.2548296
      %v993 = vmul.f32 %v992, %v984
      %v994 = vsub.f32 0.0, %v967
      %v995 = vmul.f32 %v994, %v967
      %v996 = vmul.f32 %v995, 1.442695
      %v997 = vpow.pop %v996
      %v998 = vmul.f32 %v993, %v997
      %v999 = vsub.f32 1.0, %v998
      %v1000 = vmul.f32 %v966, %v999
      %v1001 = vadd.f32 %v1000, 1.0
      %v1002 = vmul.f32 %v963, %v1001
      %v1003 = vpack.c.bf16 %v1002, %v1002
      %v1004 = vld [vmem:[%s11] sm:$0xf]
      %v1005 = vld [vmem:[%s11 + $0x4] sm:$0xf]
      %v1006 = vld [vmem:[%s11 + $0x8] sm:$0xf]
      %v1007 = vld [vmem:[%s11 + $0xc] sm:$0xf]
      %v1008 = vld [vmem:[%s11 + $0x10] sm:$0xf]
      %v1009 = vld [vmem:[%s11 + $0x14] sm:$0xf]
      %v1010 = vld [vmem:[%s11 + $0x18] sm:$0xf]
      %v1011 = vld [vmem:[%s11 + $0x1c] sm:$0xf]
      %v1012 = vld [vmem:[%s11 + $0x20] sm:$0xf]
      %v1013 = vld [vmem:[%s11 + $0x24] sm:$0xf]
      %v1014 = vld [vmem:[%s11 + $0x28] sm:$0xf]
      %v1015 = vld [vmem:[%s11 + $0x2c] sm:$0xf]
      %v1016 = vld [vmem:[%s11 + $0x30] sm:$0xf]
      %v1017 = vld [vmem:[%s11 + $0x34] sm:$0xf]
      %v1018 = vld [vmem:[%s11 + $0x38] sm:$0xf]
      %v1019 = vld [vmem:[%s11 + $0x3c] sm:$0xf]
      %v1020 = vld [vmem:[%s12] sm:$0x1]
      %v1022 = vperm.slane %v1020, 0
      %v1040 = vunpack.c.l.b16 %v1004
      %v1041 = vunpack.c.l.b16 %v1005
      %v1042 = vunpack.c.l.b16 %v1006
      %v1043 = vunpack.c.l.b16 %v1007
      %v1044 = vunpack.c.l.b16 %v1008
      %v1045 = vunpack.c.l.b16 %v1009
      %v1046 = vunpack.c.l.b16 %v1010
      %v1047 = vunpack.c.l.b16 %v1011
      %v1048 = vunpack.c.l.b16 %v1012
      %v1049 = vunpack.c.l.b16 %v1013
      %v1050 = vunpack.c.l.b16 %v1014
      %v1051 = vunpack.c.l.b16 %v1015
      %v1052 = vunpack.c.l.b16 %v1016
      %v1053 = vunpack.c.l.b16 %v1017
      %v1054 = vunpack.c.l.b16 %v1018
      %v1055 = vunpack.c.l.b16 %v1019
      %v1056 = vpack.c.b16 %v1041, %v1040
      %v1057 = vpack.c.b16 %v1043, %v1042
      %v1058 = vpack.c.b16 %v1045, %v1044
      %v1059 = vpack.c.b16 %v1047, %v1046
      %v1060 = vpack.c.b16 %v1049, %v1048
      %v1061 = vpack.c.b16 %v1051, %v1050
      %v1062 = vpack.c.b16 %v1053, %v1052
      %v1063 = vpack.c.b16 %v1055, %v1054
      %1072 = vmatpush.bf16.msra.mxu0 %v1063
      %1073 = vmatpush.bf16.msra.mxu0 %v1062
      %1074 = vmatpush.bf16.msra.mxu0 %v1061
      %1075 = vmatpush.bf16.msra.mxu0 %v1060
      %1076 = vmatpush.bf16.msra.mxu0 %v1059
      %1077 = vmatpush.bf16.msra.mxu0 %v1058
      %1078 = vmatpush.bf16.msra.mxu0 %v1057
      %1079 = vmatpush.bf16.msra.mxu0 %v1056
      %1080 = vmatmul.bf16.gmra.mxu0 %v1003
      %v1081 = vpop.f32.mrf.mxu0
      %v1082 = vadd.f32 %v1022, %v1081
      %v1083 = vpop.f32.mrf.mxu0
      %1084 = vdwg.mxu0
      %v1085 = vsel %vm505, %v1082, 0.0
      %1086 = vadd.xlane.f32.xlu0 %v1085
      %v1087 = vpop.xlane.xlu0 %1086
      %v1088 = vmul.f32 %v1087, %v897
      %v1089 = vsub.f32 %v1082, %v1088
      %v1090 = vmul.f32 %v1089, %v1089
      %v1091 = vsel %vm505, %v1090, 0.0
      %1092 = vadd.xlane.f32.xlu0 %v1091
      %v1093 = vpop.xlane.xlu0 %1092
      %v1094 = vmul.f32 %v1093, %v897
      %v1095 = vadd.f32 %v1094, 1e-05
      %v1096 = vrsqrt.pop %v1095
      %v1097 = vmul.f32 %v1096, %v1095
      %v1098 = vmul.f32 %v1097, %v1096
      %v1099 = vmul.f32 0.5, %v1098
      %v1100 = vsub.f32 1.5, %v1099
      %v1101 = vmul.f32 %v1096, %v1100
      %vm1102 = vweird.f32 %v1095
      %vm1103 = vweird.f32 %v1096
      %vm1104 = vmor %vm1102, %vm1103
      %v1105 = vsel %vm1104, %v1096, %v1101
      %v1106 = vmul.f32 %v1089, %v1105
      %v1107 = vmul.f32 %v1106, %v918
      %v1108 = vadd.f32 %v1107, %v922
      %v1109 = vadd.f32 %v925, %v1108
      %1110 = vst.msk [vmem:[%s483] sm:$0xff] %vm505, %v1109
      %p1111 = scmp.lt.s32.totalorder %s28, 1
      %s1112 = scalar_select %p1111, %s28, 1
      %p1113 = scmp.lt.s32.totalorder %s29, 0
      %s1114 = scalar_select %p1113, %s29, 0
      %s1115 = sadd.s32 %s1114, %s1112
      %s1116 = smul.addr %s1115, 8
      %s1117 = scalar_lea.vmem %s13, %s1116
      // Predicated region
      $region73: #{transformer_forward.3} parent=71 // pred_check
        %p1118 = pneg %p341
      $region74: #{transformer_forward.3} parent=71 // pred_check_branch
        %1120 = sbr.rel (%p1118) target = $region76
      $region75: #{transformer_forward.3} parent=71 // pred_region
        _
      $region76: #{transformer_forward.3} parent=71 // pred_fallthru
        _
    $region72: #{transformer_forward.3} parent=5 // pred_fallthru
      _
    %p1121 = scmp.le.s32.totalorder 2, %s19
    // Predicated region
    $region77: #{transformer_forward.3} parent=5 // pred_check
      %p1122 = pneg %p1121
    $region78: #{transformer_forward.3} parent=5 // pred_check_branch
      %1124 = sbr.rel (%p1122) target = $region80
    $region79: #{transformer_forward.3} parent=5 // pred_region
      %s1125 = ssub.s32 %s19, 2
      // Predicated region
      $region81: #{transformer_forward.3} parent=79 // pred_check
        %p1126 = pneg %p347
      $region82: #{transformer_forward.3} parent=79 // pred_check_branch
        %1128 = sbr.rel (%p1126) target = $region84
      $region83: #{transformer_forward.3} parent=79 // pred_region
        %p1129 = scmp.lt.s32.totalorder %s30, 1
        %s1130 = scalar_select %p1129, %s30, 1
        %p1131 = scmp.lt.s32.totalorder %s31, 0
        %s1132 = scalar_select %p1131, %s31, 0
        %s1133 = sadd.s32 %s1132, %s1130
        %s1134 = smul.addr %s1133, 8
        %s1135 = scalar_lea.vmem %s13, %s1134
      $region84: #{transformer_forward.3} parent=79 // pred_fallthru
        _
    $region80: #{transformer_forward.3} parent=5 // pred_fallthru
      _
  $region6: #{transformer_forward.3} parent=0 // loop_footer
    %s23 = sadd.s32 1, %s19
  $region7: #{transformer_forward.3} parent=0 // loop_footer_branch
    %18 = sbr.rel target = $region3
  $region8: #{transformer_forward.3} parent=0 // loop_exit
    _

</llo_original>
